<compile_context>
chip_gen: v6e
topology: v6e:2x2x1
jax: 0.10.0
libtpu: 0.0.40
codegen_flags: <defaults>
</compile_context>

<pallas_src>
import jax
import jax.numpy as jnp
from jax.experimental import pallas as pl
from jax.experimental.pallas import tpu as pltpu

# ----------------------------- model config (small) -----------------------------
B = 8            # batch size
S = 8            # context set size
DX, DY = 9, 1    # context_x / context_y feature dims  (DX + DY = encoder_sizes[0])
ENC_SIZES = [10, 32, 10]          # DeterministicEncoder.linears
DEEPSET_SIZES = [10, 64, 128]     # DeepSet
REP = 10                          # representation_size (== DeepSet output size)
N_DENSE = 3                       # len(dense_features)
N_SPARSE = 4                      # len(sparse_features) == len(num_embeddings)
VOC = 12                          # every vocab size (num_embeddings[i])
EMB_DIM = 8                       # embedding_dim
HIDDEN = [32, 32, 16]             # hidden_units
NSV = N_SPARSE * VOC              # 48  — width of the fused one-hot
EMB_FLAT = N_SPARSE * EMB_DIM     # 32  — flattened embedding width

# fused decoder front-end dimensions
DEC_IN = NSV + N_DENSE + REP + 1              # 62 (one-hot | dense | rep | ones)
_C_DNN0 = 0                                    # cols [0,32): dnn layer-0 pre-act
_C_FM1 = HIDDEN[0]                             # col 32     : fm 1st-order total
_C_SUME = _C_FM1 + 1                           # cols [33,41): sum_embed
_C_SUMSQ = _C_SUME + EMB_DIM                   # cols [41,49): sum_square
DEC_OUT = _C_SUMSQ + EMB_DIM                   # 49

_VMEM = pl.BlockSpec(memory_space=pltpu.MemorySpace.VMEM)


def _round8(n):
    return -(-n // 8) * 8


# --------------------------- packed parameter layout -----------------------------
# Narrow (64-lane) weight pack: every matrix with dout <= 64 lives here, 8-row
# aligned and zero padded.  Only phi_w1 (64, 128) needs full 128 lanes and is
# passed as its own buffer — total weight DMA ~140 KB instead of ~274 KB.
_WN_DEFS = [
    ("enc_w0",  ENC_SIZES[0],     ENC_SIZES[1]),      # (10, 32)
    ("encphi0", ENC_SIZES[1],     DEEPSET_SIZES[1]),  # (32, 64)  enc_w1 @ phi_w0 fused
    ("pool",    B,                B * S),             # (8, 64)   set-mean pooling const
    ("rho_w0",  DEEPSET_SIZES[2], DEEPSET_SIZES[1]),  # (128, 64)
    ("rho_w1",  DEEPSET_SIZES[1], REP),               # (64, 10)
    ("dec",     DEC_IN,           DEC_OUT),           # (62, 49)  fused decoder front-end
    ("dnn_w1",  HIDDEN[0],        HIDDEN[1]),         # (32, 32)
    ("dnn_w2",  HIDDEN[1],        HIDDEN[2]),         # (32, 16)
    ("fin_w",   HIDDEN[2],        1),                 # (16, 1)
]

_WN_LAYOUT = {}
_off = 0
for _name, _din, _dout in _WN_DEFS:
    _dinp = _round8(_din)
    _WN_LAYOUT[_name] = (_off, _dinp, _dout)
    _off += _dinp
_WN_ROWS = _off                    # 392
_WN_COLS = 64

_B_DEFS = [
    ("enc_b0",   ENC_SIZES[1]),        # 32
    ("encphi_b", DEEPSET_SIZES[1]),    # 64   (enc_b1 @ phi_w0 + phi_b0)
    ("phi_b1",   DEEPSET_SIZES[2]),    # 128
    ("rho_b0",   DEEPSET_SIZES[1]),    # 64
    ("rho_b1",   REP),                 # 10
    ("dnn_b1",   HIDDEN[1]),           # 32
    ("dnn_b2",   HIDDEN[2]),           # 16
    ("fin_b",    1),                   # 1
]
_B_LAYOUT = {n: (j, d) for j, (n, d) in enumerate(_B_DEFS)}
_BP_ROWS = _round8(len(_B_DEFS))       # 8


def pack_params(p):
    """Host-side (run once): compose & pack all weights into lane-dense buffers."""
    f32 = jnp.float32

    mats = {
        "enc_w0": p["enc_w0"],
        # no nonlinearity between the encoder's last linear and phi's first linear
        "encphi0": p["enc_w1"] @ p["phi_w0"],
        # constant mean-over-set pooling matrix (rows sum to 1)
        "pool": jnp.repeat(jnp.eye(B, dtype=f32), S, axis=1) / float(S),
        "rho_w0": p["rho_w0"],
        "rho_w1": p["rho_w1"],
        "dnn_w1": p["dnn_w1"],
        "dnn_w2": p["dnn_w2"],
        "fin_w": p["fin_w"],
    }

    # ----- fused decoder front-end weight (62 -> 49), see header comment -----
    stacked = p["fm2_tab"].reshape(NSV, EMB_DIM)                 # vstacked tables
    blockdiag = jnp.zeros((NSV, EMB_FLAT), f32)
    for i in range(N_SPARSE):
        blockdiag = blockdiag.at[i * VOC:(i + 1) * VOC,
                                 i * EMB_DIM:(i + 1) * EMB_DIM].set(p["fm2_tab"][i])
    dec = jnp.zeros((DEC_IN, DEC_OUT), f32)
    # one-hot rows (0..47)
    dec = dec.at[:NSV, _C_DNN0:_C_DNN0 + HIDDEN[0]].set(blockdiag @ p["dnn_w0_e"])
    dec = dec.at[:NSV, _C_FM1].set(p["fm1_tab"].reshape(-1))
    dec = dec.at[:NSV, _C_SUME:_C_SUME + EMB_DIM].set(stacked)
    dec = dec.at[:NSV, _C_SUMSQ:_C_SUMSQ + EMB_DIM].set(stacked * stacked)
    # dense rows (48..50)
    r0 = NSV
    dec = dec.at[r0:r0 + N_DENSE, _C_DNN0:_C_DNN0 + HIDDEN[0]].set(p["dnn_w0_d"])
    dec = dec.at[r0:r0 + N_DENSE, _C_FM1].set(p["w1_d"][:, 0])
    # representation rows (51..60)
    r0 += N_DENSE
    dec = dec.at[r0:r0 + REP, _C_DNN0:_C_DNN0 + HIDDEN[0]].set(p["dnn_w0_r"])
    dec = dec.at[r0:r0 + REP, _C_FM1].set(p["w1_r"][:, 0])
    # ones row (61): biases
    r0 += REP
    dec = dec.at[r0, _C_DNN0:_C_DNN0 + HIDDEN[0]].set(p["dnn_b0"][0])
    dec = dec.at[r0, _C_FM1].set(p["b1"][0, 0])
    mats["dec"] = dec

    wn = jnp.zeros((_WN_ROWS, _WN_COLS), f32)
    for name, (off, _dinp, dout) in _WN_LAYOUT.items():
        mat = mats[name]
        wn = wn.at[off:off + mat.shape[0], :dout].set(mat)

    biases = {
        "enc_b0": p["enc_b0"],
        "encphi_b": p["enc_b1"] @ p["phi_w0"] + p["phi_b0"],
        "phi_b1": p["phi_b1"],
        "rho_b0": p["rho_b0"],
        "rho_b1": p["rho_b1"],
        "dnn_b1": p["dnn_b1"],
        "dnn_b2": p["dnn_b2"],
        "fin_b": p["fin_b"],
    }
    bp = jnp.zeros((_BP_ROWS, 128), f32)
    for name, (j, dout) in _B_LAYOUT.items():
        bp = bp.at[j, :dout].set(biases[name].reshape(-1))

    return {"wn": wn, "wphi1": p["phi_w1"], "bp": bp}


# ------------------------------- fused Pallas kernel ------------------------------
def cdeepfm_kernel(cx_ref, cy_ref, m_ref, dense_ref, idx_ref,
                   wn_ref, wphi1_ref, bp_ref, out_ref):
    """Encoder + DeepSet + decoder (FM1 + FM2 + DNN), fully fused, single call.

    cx : (B*S, DX)   flattened context_x          dense : (B, N_DENSE) f32
    cy : (B*S, DY)   flattened context_y          idx   : (B, N_SPARSE) int32
    m  : (B*S, 1)    flattened mask               wn    : (392, 64) packed narrow weights
    wphi1 : (64, 128) phi second-layer weight     bp    : (8, 128)  packed biases
    """
    f32 = jnp.float32

    def w(name):
        off, dinp, dout = _WN_LAYOUT[name]
        return wn_ref[off:off + dinp, :dout]       # 8-aligned zero-padded block view

    def b(name):
        j, dout = _B_LAYOUT[name]
        return bp_ref[j:j + 1, :dout]

    def dot(a, bb):
        return jnp.dot(a, bb, preferred_element_type=f32)

    # ----------------- DeterministicEncoder + DeepSet (prep fused in-kernel) ------
    m = m_ref[...]                                                        # (B*S, 1)
    cx = cx_ref[...] * m                                                  # masked ctx x
    cy = cy_ref[...] * m                                                  # masked ctx y
    pad = jnp.zeros((cx.shape[0], _round8(DX + DY) - (DX + DY)), f32)
    ei = jnp.concatenate([cx, cy, pad], axis=-1)                          # (B*S, 16)

    x = jnp.maximum(dot(ei, w("enc_w0")) + b("enc_b0"), 0.0)              # (B*S, 32)
    # enc.linears[-1] and DeepSet.phi[0] composed host-side -> one matmul
    x = jnp.maximum(dot(x, w("encphi0")) + b("encphi_b"), 0.0)            # (B*S, 64)
    x = jnp.maximum(dot(x, wphi1_ref[...]) + b("phi_b1"), 0.0)            # (B*S, 128)
    # mean over the set dim as a pooling matmul (MXU, not XLU reshape+reduce)
    xs = dot(w("pool"), x)                                                # (B, 128)
    xs = jnp.maximum(dot(xs, w("rho_w0")) + b("rho_b0"), 0.0)             # (B, 64)
    rep = dot(xs, w("rho_w1")) + b("rho_b1")                              # (B, REP)

    # ----------------- decoder front-end: ONE fused matmul ------------------------
    nb = rep.shape[0]
    idx = idx_ref[...]                                                    # (B, 4) int32
    lane = jax.lax.broadcasted_iota(jnp.int32, (nb, NSV), 1)
    hit = lane == idx[:, 0:1]
    for i in range(1, N_SPARSE):
        hit = hit | (lane == (idx[:, i:i + 1] + i * VOC))
    oh = hit.astype(f32)                                                  # (B, 48)

    dense = dense_ref[...]                                                # (B, 3)
    ones = jnp.ones((nb, 1), f32)
    apad = jnp.zeros((nb, _round8(DEC_IN) - DEC_IN), f32)
    act = jnp.concatenate([oh, dense, rep, ones, apad], axis=-1)          # (B, 64)

    comb = dot(act, w("dec"))                                             # (B, 49)
    dnn_pre = comb[:, _C_DNN0:_C_DNN0 + HIDDEN[0]]                        # (B, 32)
    fm_1st = comb[:, _C_FM1:_C_FM1 + 1]                                   # (B, 1)
    sum_e = comb[:, _C_SUME:_C_SUME + EMB_DIM]                            # (B, 8)
    sum_sq = comb[:, _C_SUMSQ:_C_SUMSQ + EMB_DIM]                         # (B, 8)
    fm_2nd = 0.5 * jnp.sum(sum_e * sum_e - sum_sq, axis=1, keepdims=True)

    h = jnp.maximum(dnn_pre, 0.0)
    h = jnp.maximum(dot(h, w("dnn_w1")) + b("dnn_b1"), 0.0)
    h = jnp.maximum(dot(h, w("dnn_w2")) + b("dnn_b2"), 0.0)
    dnn_out = dot(h, w("fin_w")) + b("fin_b")

    out_ref[...] = fm_1st + fm_2nd + dnn_out


# ----------------------------------- wrapper --------------------------------------
@jax.jit
def cdeepfm_forward(packed, context_x, context_y, mask_matrix, dense_x, sparse_idx):
    b, s, dx = context_x.shape
    cx = context_x.reshape(b * s, dx)
    cy = context_y.reshape(b * s, -1)
    mm = mask_matrix.reshape(b * s, 1).astype(jnp.float32)

    args = (cx, cy, mm, dense_x.astype(jnp.float32), sparse_idx.astype(jnp.int32),
            packed["wn"], packed["wphi1"], packed["bp"])
    return pl.pallas_call(
        cdeepfm_kernel,
        out_shape=jax.ShapeDtypeStruct((b, 1), jnp.float32),
        in_specs=[_VMEM] * len(args),
        out_specs=_VMEM,
    )(*args)


# ------------------------------ reference (pure JAX) -------------------------------
def reference_forward(p, context_x, context_y, mask_matrix, dense_x, sparse_idx):
    b, s, _ = context_x.shape
    m = mask_matrix[..., None]
    ei = jnp.concatenate([context_x * m, context_y * m], axis=-1).reshape(b * s, -1)
    x = jnp.maximum(ei @ p["enc_w0"] + p["enc_b0"], 0.0)
    x = x @ p["enc_w1"] + p["enc_b1"]
    x = jnp.maximum(x @ p["phi_w0"] + p["phi_b0"], 0.0)
    x = jnp.maximum(x @ p["phi_w1"] + p["phi_b1"], 0.0)
    x = x.reshape(b, s, -1).mean(axis=1)
    x = jnp.maximum(x @ p["rho_w0"] + p["rho_b0"], 0.0)
    rep = x @ p["rho_w1"] + p["rho_b1"]

    dense_input = jnp.concatenate([dense_x, rep], axis=-1)

    fm1_sparse = jnp.zeros((b, 1), jnp.float32)
    embs = []
    for i in range(N_SPARSE):
        oh = jax.nn.one_hot(sparse_idx[:, i], VOC, dtype=jnp.float32)
        fm1_sparse = fm1_sparse + oh @ p["fm1_tab"][i][:, None]
        embs.append(oh @ p["fm2_tab"][i])
    fm1_dense = dense_input @ jnp.concatenate([p["w1_d"], p["w1_r"]], 0) + p["b1"]
    fm_1st = fm1_sparse + fm1_dense

    emb = jnp.stack(embs, axis=1)                       # (B, N_SPARSE, EMB_DIM)
    sum_embed = emb.sum(1)
    fm_2nd = 0.5 * (sum_embed ** 2 - (emb ** 2).sum(1)).sum(1, keepdims=True)

    dnn_in = jnp.concatenate([emb.reshape(b, -1), dense_input], axis=-1)
    w0 = jnp.concatenate([p["dnn_w0_e"], p["dnn_w0_d"], p["dnn_w0_r"]], 0)
    x = jnp.maximum(dnn_in @ w0 + p["dnn_b0"], 0.0)
    x = jnp.maximum(x @ p["dnn_w1"] + p["dnn_b1"], 0.0)
    x = jnp.maximum(x @ p["dnn_w2"] + p["dnn_b2"], 0.0)
    dnn_out = x @ p["fin_w"] + p["fin_b"]
    return fm_1st + fm_2nd + dnn_out


# -------------------------------- param init ---------------------------------------
def init_params(key):
    keys = iter(jax.random.split(key, 64))

    def lin(din, dout):
        w = 0.1 * jax.random.normal(next(keys), (din, dout), jnp.float32)
        bb = 0.1 * jax.random.normal(next(keys), (1, dout), jnp.float32)
        return w, bb

    p = {}
    p["enc_w0"], p["enc_b0"] = lin(ENC_SIZES[0], ENC_SIZES[1])
    p["enc_w1"], p["enc_b1"] = lin(ENC_SIZES[1], ENC_SIZES[2])
    p["phi_w0"], p["phi_b0"] = lin(DEEPSET_SIZES[0], DEEPSET_SIZES[1])
    p["phi_w1"], p["phi_b1"] = lin(DEEPSET_SIZES[1], DEEPSET_SIZES[2])
    p["rho_w0"], p["rho_b0"] = lin(DEEPSET_SIZES[2], DEEPSET_SIZES[1])
    p["rho_w1"], p["rho_b1"] = lin(DEEPSET_SIZES[1], DEEPSET_SIZES[0])

    p["fm1_tab"] = 0.1 * jax.random.normal(next(keys), (N_SPARSE, VOC), jnp.float32)
    p["fm2_tab"] = 0.1 * jax.random.normal(next(keys), (N_SPARSE, VOC, EMB_DIM), jnp.float32)

    w1, p["b1"] = lin(N_DENSE + REP, 1)
    p["w1_d"], p["w1_r"] = w1[:N_DENSE], w1[N_DENSE:]

    w0, p["dnn_b0"] = lin(EMB_FLAT + N_DENSE + REP, HIDDEN[0])
    p["dnn_w0_e"] = w0[:EMB_FLAT]
    p["dnn_w0_d"] = w0[EMB_FLAT:EMB_FLAT + N_DENSE]
    p["dnn_w0_r"] = w0[EMB_FLAT + N_DENSE:]
    p["dnn_w1"], p["dnn_b1"] = lin(HIDDEN[0], HIDDEN[1])
    p["dnn_w2"], p["dnn_b2"] = lin(HIDDEN[1], HIDDEN[2])
    p["fin_w"], p["fin_b"] = lin(HIDDEN[2], 1)
    return p


# ------------------------------------ main -----------------------------------------
if __name__ == "__main__":
    root = jax.random.PRNGKey(0)
    kp, kx, ky, km, kd, ks = jax.random.split(root, 6)

    params = init_params(kp)
    packed = pack_params(params)          # one-time host-side packing / composition

    context_x = jax.random.normal(kx, (B, S, DX), jnp.float32)
    context_y = jax.random.normal(ky, (B, S, DY), jnp.float32)
    mask_matrix = (jax.random.uniform(km, (B, S)) > 0.3).astype(jnp.float32)
    dense_x = jax.random.normal(kd, (B, N_DENSE), jnp.float32)
    sparse_idx = jax.random.randint(ks, (B, N_SPARSE), 0, VOC, dtype=jnp.int32)

    out = cdeepfm_forward(packed, context_x, context_y, mask_matrix, dense_x, sparse_idx)
    out = jax.block_until_ready(out)

    ref = reference_forward(params, context_x, context_y, mask_matrix, dense_x, sparse_idx)
    assert out.shape == (B, 1)
    assert bool(jnp.allclose(out, ref, rtol=1e-3, atol=1e-3))

    print("KERNEL_OK")
</pallas_src>

<mosaic_0001>
module attributes {stable_mosaic.version = 11 : i64} {
  func.func @cdeepfm_kernel(%arg0: memref<64x9xf32, #tpu.memory_space<vmem>>, %arg1: memref<64x1xf32, #tpu.memory_space<vmem>>, %arg2: memref<64x1xf32, #tpu.memory_space<vmem>>, %arg3: memref<8x3xf32, #tpu.memory_space<vmem>>, %arg4: memref<8x4xi32, #tpu.memory_space<vmem>>, %arg5: memref<392x64xf32, #tpu.memory_space<vmem>>, %arg6: memref<64x128xf32, #tpu.memory_space<vmem>>, %arg7: memref<8x128xf32, #tpu.memory_space<vmem>>, %arg8: memref<8x1xf32, #tpu.memory_space<vmem>>) attributes {dimension_semantics = [], scalar_prefetch = 0 : i64, scratch_operands = 0 : i64, tpu.core_type = #tpu.core_type<tc>} {
    %c0 = arith.constant 0 : index
    %c0_0 = arith.constant 0 : index
    %0 = vector.load %arg2[%c0, %c0_0] : memref<64x1xf32, #tpu.memory_space<vmem>>, vector<64x1xf32>
    %c0_1 = arith.constant 0 : index
    %c0_2 = arith.constant 0 : index
    %1 = vector.load %arg0[%c0_1, %c0_2] : memref<64x9xf32, #tpu.memory_space<vmem>>, vector<64x9xf32>
    %2 = vector.broadcast %0 : vector<64x1xf32> to vector<64x9xf32>
    %3 = arith.mulf %1, %2 : vector<64x9xf32>
    %c0_3 = arith.constant 0 : index
    %c0_4 = arith.constant 0 : index
    %4 = vector.load %arg1[%c0_3, %c0_4] : memref<64x1xf32, #tpu.memory_space<vmem>>, vector<64x1xf32>
    %5 = arith.mulf %4, %0 : vector<64x1xf32>
    %cst = arith.constant 0.000000e+00 : f32
    %6 = vector.broadcast %cst : f32 to vector<64x6xf32>
    %7 = tpu.concatenate %3, %5, %6 in 1 : vector<64x9xf32>, vector<64x1xf32>, vector<64x6xf32> -> vector<64x16xf32>
    %c0_5 = arith.constant 0 : index
    %c0_6 = arith.constant 0 : index
    %8 = vector.load %arg5[%c0_5, %c0_6] : memref<392x64xf32, #tpu.memory_space<vmem>>, vector<16x32xf32>
    %cst_7 = arith.constant dense<0.000000e+00> : vector<64x32xf32>
    %9 = tpu.matmul %7, %8, %cst_7 {dimension_numbers = #tpu.dot_dimension_numbers<[1], [0], [0], [1], [0, 0, 1, 1], [], []>} : vector<64x16xf32>, vector<16x32xf32>, vector<64x32xf32> -> vector<64x32xf32>
    %c0_8 = arith.constant 0 : index
    %c0_9 = arith.constant 0 : index
    %10 = vector.load %arg7[%c0_8, %c0_9] : memref<8x128xf32, #tpu.memory_space<vmem>>, vector<1x32xf32>
    %11 = vector.broadcast %10 : vector<1x32xf32> to vector<64x32xf32>
    %12 = arith.addf %9, %11 : vector<64x32xf32>
    %cst_10 = arith.constant 0.000000e+00 : f32
    %13 = vector.broadcast %cst_10 : f32 to vector<64x32xf32>
    %14 = arith.maximumf %12, %13 : vector<64x32xf32>
    %c16 = arith.constant 16 : index
    %c0_11 = arith.constant 0 : index
    %15 = vector.load %arg5[%c16, %c0_11] : memref<392x64xf32, #tpu.memory_space<vmem>>, vector<32x64xf32>
    %cst_12 = arith.constant dense<0.000000e+00> : vector<64x64xf32>
    %16 = tpu.matmul %14, %15, %cst_12 {dimension_numbers = #tpu.dot_dimension_numbers<[1], [0], [0], [1], [0, 0, 1, 1], [], []>} : vector<64x32xf32>, vector<32x64xf32>, vector<64x64xf32> -> vector<64x64xf32>
    %c1 = arith.constant 1 : index
    %c0_13 = arith.constant 0 : index
    %17 = vector.load %arg7[%c1, %c0_13] : memref<8x128xf32, #tpu.memory_space<vmem>>, vector<1x64xf32>
    %18 = vector.broadcast %17 : vector<1x64xf32> to vector<64x64xf32>
    %19 = arith.addf %16, %18 : vector<64x64xf32>
    %cst_14 = arith.constant 0.000000e+00 : f32
    %20 = vector.broadcast %cst_14 : f32 to vector<64x64xf32>
    %21 = arith.maximumf %19, %20 : vector<64x64xf32>
    %c0_15 = arith.constant 0 : index
    %c0_16 = arith.constant 0 : index
    %22 = vector.load %arg6[%c0_15, %c0_16] : memref<64x128xf32, #tpu.memory_space<vmem>>, vector<64x128xf32>
    %cst_17 = arith.constant dense<0.000000e+00> : vector<64x128xf32>
    %23 = tpu.matmul %21, %22, %cst_17 {dimension_numbers = #tpu.dot_dimension_numbers<[1], [0], [0], [1], [0, 0, 1, 1], [], []>} : vector<64x64xf32>, vector<64x128xf32>, vector<64x128xf32> -> vector<64x128xf32>
    %c2 = arith.constant 2 : index
    %c0_18 = arith.constant 0 : index
    %24 = vector.load %arg7[%c2, %c0_18] : memref<8x128xf32, #tpu.memory_space<vmem>>, vector<1x128xf32>
    %25 = vector.broadcast %24 : vector<1x128xf32> to vector<64x128xf32>
    %26 = arith.addf %23, %25 : vector<64x128xf32>
    %cst_19 = arith.constant 0.000000e+00 : f32
    %27 = vector.broadcast %cst_19 : f32 to vector<64x128xf32>
    %28 = arith.maximumf %26, %27 : vector<64x128xf32>
    %c48 = arith.constant 48 : index
    %c0_20 = arith.constant 0 : index
    %29 = vector.load %arg5[%c48, %c0_20] : memref<392x64xf32, #tpu.memory_space<vmem>>, vector<8x64xf32>
    %cst_21 = arith.constant dense<0.000000e+00> : vector<8x128xf32>
    %30 = tpu.matmul %29, %28, %cst_21 {dimension_numbers = #tpu.dot_dimension_numbers<[1], [0], [0], [1], [0, 0, 1, 1], [], []>} : vector<8x64xf32>, vector<64x128xf32>, vector<8x128xf32> -> vector<8x128xf32>
    %c56 = arith.constant 56 : index
    %c0_22 = arith.constant 0 : index
    %31 = vector.load %arg5[%c56, %c0_22] : memref<392x64xf32, #tpu.memory_space<vmem>>, vector<128x64xf32>
    %cst_23 = arith.constant dense<0.000000e+00> : vector<8x64xf32>
    %32 = tpu.matmul %30, %31, %cst_23 {dimension_numbers = #tpu.dot_dimension_numbers<[1], [0], [0], [1], [0, 0, 1, 1], [], []>} : vector<8x128xf32>, vector<128x64xf32>, vector<8x64xf32> -> vector<8x64xf32>
    %c3 = arith.constant 3 : index
    %c0_24 = arith.constant 0 : index
    %33 = vector.load %arg7[%c3, %c0_24] : memref<8x128xf32, #tpu.memory_space<vmem>>, vector<1x64xf32>
    %34 = vector.broadcast %33 : vector<1x64xf32> to vector<8x64xf32>
    %35 = arith.addf %32, %34 : vector<8x64xf32>
    %cst_25 = arith.constant 0.000000e+00 : f32
    %36 = vector.broadcast %cst_25 : f32 to vector<8x64xf32>
    %37 = arith.maximumf %35, %36 : vector<8x64xf32>
    %c184 = arith.constant 184 : index
    %c0_26 = arith.constant 0 : index
    %38 = vector.load %arg5[%c184, %c0_26] : memref<392x64xf32, #tpu.memory_space<vmem>>, vector<64x10xf32>
    %cst_27 = arith.constant dense<0.000000e+00> : vector<8x10xf32>
    %39 = tpu.matmul %37, %38, %cst_27 {dimension_numbers = #tpu.dot_dimension_numbers<[1], [0], [0], [1], [0, 0, 1, 1], [], []>} : vector<8x64xf32>, vector<64x10xf32>, vector<8x10xf32> -> vector<8x10xf32>
    %c4 = arith.constant 4 : index
    %c0_28 = arith.constant 0 : index
    %40 = vector.load %arg7[%c4, %c0_28] : memref<8x128xf32, #tpu.memory_space<vmem>>, vector<1x10xf32>
    %41 = vector.broadcast %40 : vector<1x10xf32> to vector<8x10xf32>
    %42 = arith.addf %39, %41 : vector<8x10xf32>
    %c0_29 = arith.constant 0 : index
    %c0_30 = arith.constant 0 : index
    %43 = vector.load %arg4[%c0_29, %c0_30] : memref<8x4xi32, #tpu.memory_space<vmem>>, vector<8x4xi32>
    %44 = tpu.iota {dimensions = array<i32: 1>} : vector<8x48xi32>
    %45 = vector.extract_strided_slice %43 {offsets = [0, 0], sizes = [8, 1], strides = [1, 1]} : vector<8x4xi32> to vector<8x1xi32>
    %46 = vector.broadcast %45 : vector<8x1xi32> to vector<8x48xi32>
    %47 = arith.cmpi eq, %44, %46 : vector<8x48xi32>
    %48 = vector.extract_strided_slice %43 {offsets = [0, 1], sizes = [8, 1], strides = [1, 1]} : vector<8x4xi32> to vector<8x1xi32>
    %c12_i32 = arith.constant 12 : i32
    %49 = vector.broadcast %c12_i32 : i32 to vector<8x1xi32>
    %50 = arith.addi %48, %49 : vector<8x1xi32>
    %51 = vector.broadcast %50 : vector<8x1xi32> to vector<8x48xi32>
    %52 = arith.cmpi eq, %44, %51 : vector<8x48xi32>
    %53 = arith.ori %47, %52 : vector<8x48xi1>
    %54 = vector.extract_strided_slice %43 {offsets = [0, 2], sizes = [8, 1], strides = [1, 1]} : vector<8x4xi32> to vector<8x1xi32>
    %c24_i32 = arith.constant 24 : i32
    %55 = vector.broadcast %c24_i32 : i32 to vector<8x1xi32>
    %56 = arith.addi %54, %55 : vector<8x1xi32>
    %57 = vector.broadcast %56 : vector<8x1xi32> to vector<8x48xi32>
    %58 = arith.cmpi eq, %44, %57 : vector<8x48xi32>
    %59 = arith.ori %53, %58 : vector<8x48xi1>
    %60 = vector.extract_strided_slice %43 {offsets = [0, 3], sizes = [8, 1], strides = [1, 1]} : vector<8x4xi32> to vector<8x1xi32>
    %c36_i32 = arith.constant 36 : i32
    %61 = vector.broadcast %c36_i32 : i32 to vector<8x1xi32>
    %62 = arith.addi %60, %61 : vector<8x1xi32>
    %63 = vector.broadcast %62 : vector<8x1xi32> to vector<8x48xi32>
    %64 = arith.cmpi eq, %44, %63 : vector<8x48xi32>
    %65 = arith.ori %59, %64 : vector<8x48xi1>
    %66 = arith.extui %65 : vector<8x48xi1> to vector<8x48xi32>
    %67 = arith.sitofp %66 : vector<8x48xi32> to vector<8x48xf32>
    %c0_31 = arith.constant 0 : index
    %c0_32 = arith.constant 0 : index
    %68 = vector.load %arg3[%c0_31, %c0_32] : memref<8x3xf32, #tpu.memory_space<vmem>>, vector<8x3xf32>
    %cst_33 = arith.constant 1.000000e+00 : f32
    %69 = vector.broadcast %cst_33 : f32 to vector<8x1xf32>
    %cst_34 = arith.constant 0.000000e+00 : f32
    %70 = vector.broadcast %cst_34 : f32 to vector<8x2xf32>
    %71 = tpu.concatenate %67, %68, %42, %69, %70 in 1 : vector<8x48xf32>, vector<8x3xf32>, vector<8x10xf32>, vector<8x1xf32>, vector<8x2xf32> -> vector<8x64xf32>
    %c248 = arith.constant 248 : index
    %c0_35 = arith.constant 0 : index
    %72 = vector.load %arg5[%c248, %c0_35] : memref<392x64xf32, #tpu.memory_space<vmem>>, vector<64x49xf32>
    %cst_36 = arith.constant dense<0.000000e+00> : vector<8x49xf32>
    %73 = tpu.matmul %71, %72, %cst_36 {dimension_numbers = #tpu.dot_dimension_numbers<[1], [0], [0], [1], [0, 0, 1, 1], [], []>} : vector<8x64xf32>, vector<64x49xf32>, vector<8x49xf32> -> vector<8x49xf32>
    %74 = vector.extract_strided_slice %73 {offsets = [0, 0], sizes = [8, 32], strides = [1, 1]} : vector<8x49xf32> to vector<8x32xf32>
    %75 = vector.extract_strided_slice %73 {offsets = [0, 32], sizes = [8, 1], strides = [1, 1]} : vector<8x49xf32> to vector<8x1xf32>
    %76 = vector.extract_strided_slice %73 {offsets = [0, 33], sizes = [8, 8], strides = [1, 1]} : vector<8x49xf32> to vector<8x8xf32>
    %77 = vector.extract_strided_slice %73 {offsets = [0, 41], sizes = [8, 8], strides = [1, 1]} : vector<8x49xf32> to vector<8x8xf32>
    %78 = arith.mulf %76, %76 : vector<8x8xf32>
    %79 = arith.subf %78, %77 : vector<8x8xf32>
    %cst_37 = arith.constant dense<0.000000e+00> : vector<8xf32>
    %80 = vector.multi_reduction <add>, %79, %cst_37 [1] : vector<8x8xf32> to vector<8xf32>
    %81 = vector.shape_cast %80 : vector<8xf32> to vector<8x1xf32>
    %cst_38 = arith.constant 5.000000e-01 : f32
    %82 = vector.broadcast %cst_38 : f32 to vector<8x1xf32>
    %83 = arith.mulf %82, %81 : vector<8x1xf32>
    %cst_39 = arith.constant 0.000000e+00 : f32
    %84 = vector.broadcast %cst_39 : f32 to vector<8x32xf32>
    %85 = arith.maximumf %74, %84 : vector<8x32xf32>
    %c312 = arith.constant 312 : index
    %c0_40 = arith.constant 0 : index
    %86 = vector.load %arg5[%c312, %c0_40] : memref<392x64xf32, #tpu.memory_space<vmem>>, vector<32x32xf32>
    %cst_41 = arith.constant dense<0.000000e+00> : vector<8x32xf32>
    %87 = tpu.matmul %85, %86, %cst_41 {dimension_numbers = #tpu.dot_dimension_numbers<[1], [0], [0], [1], [0, 0, 1, 1], [], []>} : vector<8x32xf32>, vector<32x32xf32>, vector<8x32xf32> -> vector<8x32xf32>
    %c5 = arith.constant 5 : index
    %c0_42 = arith.constant 0 : index
    %88 = vector.load %arg7[%c5, %c0_42] : memref<8x128xf32, #tpu.memory_space<vmem>>, vector<1x32xf32>
    %89 = vector.broadcast %88 : vector<1x32xf32> to vector<8x32xf32>
    %90 = arith.addf %87, %89 : vector<8x32xf32>
    %cst_43 = arith.constant 0.000000e+00 : f32
    %91 = vector.broadcast %cst_43 : f32 to vector<8x32xf32>
    %92 = arith.maximumf %90, %91 : vector<8x32xf32>
    %c344 = arith.constant 344 : index
    %c0_44 = arith.constant 0 : index
    %93 = vector.load %arg5[%c344, %c0_44] : memref<392x64xf32, #tpu.memory_space<vmem>>, vector<32x16xf32>
    %cst_45 = arith.constant dense<0.000000e+00> : vector<8x16xf32>
    %94 = tpu.matmul %92, %93, %cst_45 {dimension_numbers = #tpu.dot_dimension_numbers<[1], [0], [0], [1], [0, 0, 1, 1], [], []>} : vector<8x32xf32>, vector<32x16xf32>, vector<8x16xf32> -> vector<8x16xf32>
    %c6 = arith.constant 6 : index
    %c0_46 = arith.constant 0 : index
    %95 = vector.load %arg7[%c6, %c0_46] : memref<8x128xf32, #tpu.memory_space<vmem>>, vector<1x16xf32>
    %96 = vector.broadcast %95 : vector<1x16xf32> to vector<8x16xf32>
    %97 = arith.addf %94, %96 : vector<8x16xf32>
    %cst_47 = arith.constant 0.000000e+00 : f32
    %98 = vector.broadcast %cst_47 : f32 to vector<8x16xf32>
    %99 = arith.maximumf %97, %98 : vector<8x16xf32>
    %c376 = arith.constant 376 : index
    %c0_48 = arith.constant 0 : index
    %100 = vector.load %arg5[%c376, %c0_48] : memref<392x64xf32, #tpu.memory_space<vmem>>, vector<16x1xf32>
    %cst_49 = arith.constant dense<0.000000e+00> : vector<8x1xf32>
    %101 = tpu.matmul %99, %100, %cst_49 {dimension_numbers = #tpu.dot_dimension_numbers<[1], [0], [0], [1], [0, 0, 1, 1], [], []>} : vector<8x16xf32>, vector<16x1xf32>, vector<8x1xf32> -> vector<8x1xf32>
    %c7 = arith.constant 7 : index
    %c0_50 = arith.constant 0 : index
    %102 = vector.load %arg7[%c7, %c0_50] : memref<8x128xf32, #tpu.memory_space<vmem>>, vector<1x1xf32>
    %103 = vector.broadcast %102 : vector<1x1xf32> to vector<8x1xf32>
    %104 = arith.addf %101, %103 : vector<8x1xf32>
    %105 = arith.addf %75, %83 : vector<8x1xf32>
    %106 = arith.addf %105, %104 : vector<8x1xf32>
    %c0_51 = arith.constant 0 : index
    %c0_52 = arith.constant 0 : index
    %107 = vector.load %arg8[%c0_51, %c0_52] : memref<8x1xf32, #tpu.memory_space<vmem>>, vector<8x1xf32>
    tpu.vector_store %arg8[%c0_51, %c0_52], %106 {strides = array<i32>} : memref<8x1xf32, #tpu.memory_space<vmem>>, vector<8x1xf32>,
    return
  }
}

</mosaic_0001>

<llo_original>
// kernel: cdeepfm_forward.1
$region0: #{cdeepfm_forward.1}
  #allocation0 [shape = 'u32[]', space=smem, size = 0x4, offset = 0x4, fixed_abs, tag = 'smem constant byte address 0x4 - core index']
  #allocation1 [shape = 'u32[144,128]{1,0:T(1,128)}', space=vmem, size = 0x12000, scoped, tag = 'internal scratch']
  %s0 = inlined_call_operand.vmem [shape: f32[64,9], index: 0, kind: input, shape index: {}]
  %s1 = inlined_call_operand.vmem [shape: f32[64,1], index: 1, kind: input, shape index: {}]
  %s2 = inlined_call_operand.vmem [shape: f32[64,1], index: 2, kind: input, shape index: {}]
  %s3 = inlined_call_operand.vmem [shape: f32[8,3], index: 3, kind: input, shape index: {}]
  %s4 = inlined_call_operand.vmem [shape: s32[8,4], index: 4, kind: input, shape index: {}]
  %s5 = inlined_call_operand.vmem [shape: f32[392,64], index: 5, kind: input, shape index: {}]
  %s6 = inlined_call_operand.vmem [shape: f32[64,128], index: 6, kind: input, shape index: {}]
  %s7 = inlined_call_operand.vmem [shape: f32[8,128], index: 7, kind: input, shape index: {}]
  %s8 = inlined_call_operand.vmem [shape: f32[8,1], index: 8, kind: output, shape index: {}]
  %s9 = sld [smem:[#allocation0]]
  $region42: #{cdeepfm_forward.1} parent=0
    _
  %s11 = ssub.s32 1, %s9
  %s12 = scalar_select 0, %s11, %s9
  // Predicated region
  $region2: #{cdeepfm_forward.1} parent=0 // pred_check
    _
  $region3: #{cdeepfm_forward.1} parent=0 // pred_check_branch
    %14 = sbr.rel (0) target = $region5
  $region4: #{cdeepfm_forward.1} parent=0 // pred_region
    _
  $region5: #{cdeepfm_forward.1} parent=0 // pred_fallthru
    _
  // Predicated region
  $region6: #{cdeepfm_forward.1} parent=0 // pred_check
    _
  $region7: #{cdeepfm_forward.1} parent=0 // pred_check_branch
    %16 = sbr.rel (0) target = $region9
  $region8: #{cdeepfm_forward.1} parent=0 // pred_region
    _
  $region9: #{cdeepfm_forward.1} parent=0 // pred_fallthru
    _
  // Predicated region
  $region10: #{cdeepfm_forward.1} parent=0 // pred_check
    _
  $region11: #{cdeepfm_forward.1} parent=0 // pred_check_branch
    %18 = sbr.rel (0) target = $region13
  $region12: #{cdeepfm_forward.1} parent=0 // pred_region
    _
  $region13: #{cdeepfm_forward.1} parent=0 // pred_fallthru
    _
  // Predicated region
  $region14: #{cdeepfm_forward.1} parent=0 // pred_check
    _
  $region15: #{cdeepfm_forward.1} parent=0 // pred_check_branch
    %20 = sbr.rel (0) target = $region17
  $region16: #{cdeepfm_forward.1} parent=0 // pred_region
    _
  $region17: #{cdeepfm_forward.1} parent=0 // pred_fallthru
    _
  // Predicated region
  $region18: #{cdeepfm_forward.1} parent=0 // pred_check
    _
  $region19: #{cdeepfm_forward.1} parent=0 // pred_check_branch
    %22 = sbr.rel (0) target = $region21
  $region20: #{cdeepfm_forward.1} parent=0 // pred_region
    _
  $region21: #{cdeepfm_forward.1} parent=0 // pred_fallthru
    _
  // Predicated region
  $region22: #{cdeepfm_forward.1} parent=0 // pred_check
    _
  $region23: #{cdeepfm_forward.1} parent=0 // pred_check_branch
    %24 = sbr.rel (0) target = $region25
  $region24: #{cdeepfm_forward.1} parent=0 // pred_region
    _
  $region25: #{cdeepfm_forward.1} parent=0 // pred_fallthru
    _
  // Predicated region
  $region26: #{cdeepfm_forward.1} parent=0 // pred_check
    _
  $region27: #{cdeepfm_forward.1} parent=0 // pred_check_branch
    %26 = sbr.rel (0) target = $region29
  $region28: #{cdeepfm_forward.1} parent=0 // pred_region
    _
  $region29: #{cdeepfm_forward.1} parent=0 // pred_fallthru
    _
  // Predicated region
  $region30: #{cdeepfm_forward.1} parent=0 // pred_check
    _
  $region31: #{cdeepfm_forward.1} parent=0 // pred_check_branch
    %28 = sbr.rel (0) target = $region33
  $region32: #{cdeepfm_forward.1} parent=0 // pred_region
    _
  $region33: #{cdeepfm_forward.1} parent=0 // pred_fallthru
    _
  %v29 = vld [vmem:[%s2] sm:$0xff]
  %v30 = vld [vmem:[%s2 + $0x8] sm:$0xff]
  %v31 = vld [vmem:[%s2 + $0x10] sm:$0xff]
  %v32 = vld [vmem:[%s2 + $0x18] sm:$0xff]
  %v33 = vld [vmem:[%s2 + $0x20] sm:$0xff]
  %v34 = vld [vmem:[%s2 + $0x28] sm:$0xff]
  %v35 = vld [vmem:[%s2 + $0x30] sm:$0xff]
  %v36 = vld [vmem:[%s2 + $0x38] sm:$0xff]
  %v37 = vld [vmem:[%s0] sm:$0xff]
  %v38 = vld [vmem:[%s0 + $0x8] sm:$0xff]
  %v39 = vld [vmem:[%s0 + $0x10] sm:$0xff]
  %v40 = vld [vmem:[%s0 + $0x18] sm:$0xff]
  %v41 = vld [vmem:[%s0 + $0x20] sm:$0xff]
  %v42 = vld [vmem:[%s0 + $0x28] sm:$0xff]
  %v43 = vld [vmem:[%s0 + $0x30] sm:$0xff]
  %v44 = vld [vmem:[%s0 + $0x38] sm:$0xff]
  %46 = vset.pattern.permute.xlu0 0
  %47 = vperm.xlu0 %46, %v29
  %v48 = vpop.permute.xlu0 %47
  %51 = vset.pattern.permute.xlu0 0
  %52 = vperm.xlu0 %51, %v30
  %v53 = vpop.permute.xlu0 %52
  %56 = vset.pattern.permute.xlu0 0
  %57 = vperm.xlu0 %56, %v31
  %v58 = vpop.permute.xlu0 %57
  %61 = vset.pattern.permute.xlu0 0
  %62 = vperm.xlu0 %61, %v32
  %v63 = vpop.permute.xlu0 %62
  %66 = vset.pattern.permute.xlu0 0
  %67 = vperm.xlu0 %66, %v33
  %v68 = vpop.permute.xlu0 %67
  %71 = vset.pattern.permute.xlu0 0
  %72 = vperm.xlu0 %71, %v34
  %v73 = vpop.permute.xlu0 %72
  %76 = vset.pattern.permute.xlu0 0
  %77 = vperm.xlu0 %76, %v35
  %v78 = vpop.permute.xlu0 %77
  %81 = vset.pattern.permute.xlu0 0
  %82 = vperm.xlu0 %81, %v36
  %v83 = vpop.permute.xlu0 %82
  %v85 = vmul.f32 %v37, %v48
  %v86 = vmul.f32 %v38, %v53
  %v87 = vmul.f32 %v39, %v58
  %v88 = vmul.f32 %v40, %v63
  %v89 = vmul.f32 %v41, %v68
  %v90 = vmul.f32 %v42, %v73
  %v91 = vmul.f32 %v43, %v78
  %v92 = vmul.f32 %v44, %v83
  %v93 = vld [vmem:[%s1] sm:$0xff]
  %v94 = vld [vmem:[%s1 + $0x8] sm:$0xff]
  %v95 = vld [vmem:[%s1 + $0x10] sm:$0xff]
  %v96 = vld [vmem:[%s1 + $0x18] sm:$0xff]
  %v97 = vld [vmem:[%s1 + $0x20] sm:$0xff]
  %v98 = vld [vmem:[%s1 + $0x28] sm:$0xff]
  %v99 = vld [vmem:[%s1 + $0x30] sm:$0xff]
  %v100 = vld [vmem:[%s1 + $0x38] sm:$0xff]
  %v101 = vmul.f32 %v93, %v29
  %v102 = vmul.f32 %v94, %v30
  %v103 = vmul.f32 %v95, %v31
  %v104 = vmul.f32 %v96, %v32
  %v105 = vmul.f32 %v97, %v33
  %v106 = vmul.f32 %v98, %v34
  %v107 = vmul.f32 %v99, %v35
  %v108 = vmul.f32 %v100, %v36
  %117 = vrot.lane.b32.xlu0 %v101, 9
  %v118 = vpop.permute.xlu0 %117
  %119 = vrot.lane.b32.xlu0 %v102, 9
  %v120 = vpop.permute.xlu0 %119
  %121 = vrot.lane.b32.xlu0 %v103, 9
  %v122 = vpop.permute.xlu0 %121
  %123 = vrot.lane.b32.xlu0 %v104, 9
  %v124 = vpop.permute.xlu0 %123
  %125 = vrot.lane.b32.xlu0 %v105, 9
  %v126 = vpop.permute.xlu0 %125
  %127 = vrot.lane.b32.xlu0 %v106, 9
  %v128 = vpop.permute.xlu0 %127
  %129 = vrot.lane.b32.xlu0 %v107, 9
  %v130 = vpop.permute.xlu0 %129
  %131 = vrot.lane.b32.xlu0 %v108, 9
  %v132 = vpop.permute.xlu0 %131
  %vm141 = vcmask 72704
  %v142 = vsel %vm141, %v85, %v118
  %v143 = vsel %vm141, %v86, %v120
  %v144 = vsel %vm141, %v87, %v122
  %v145 = vsel %vm141, %v88, %v124
  %v146 = vsel %vm141, %v89, %v126
  %v147 = vsel %vm141, %v90, %v128
  %v148 = vsel %vm141, %v91, %v130
  %v149 = vsel %vm141, %v92, %v132
  %vm150 = vcmask 80896
  %v151 = vsel %vm150, %v142, 0.0
  %v152 = vsel %vm150, %v143, 0.0
  %v153 = vsel %vm150, %v144, 0.0
  %v154 = vsel %vm150, %v145, 0.0
  %v155 = vsel %vm150, %v146, 0.0
  %v156 = vsel %vm150, %v147, 0.0
  %v157 = vsel %vm150, %v148, 0.0
  %v158 = vsel %vm150, %v149, 0.0
  %v159 = vld [vmem:[%s5] sm:$0xff]
  %v160 = vld [vmem:[%s5 + $0x8] sm:$0xff]
  %v161 = vld [vmem:[%s7] sm:$0x1]
  %v162 = vlaneseq
  %v163 = vshrl.u32 %v162, 7
  %v164 = vsub.s32 0, %v163
  %v165 = vrot.slane %v161, %v164
  %vm166 = vcmask 130048
  %v168 = vsel %vm166, %v151, 0
  %v171 = vsel %vm166, %v152, 0
  %v174 = vsel %vm166, %v153, 0
  %v177 = vsel %vm166, %v154, 0
  %v180 = vsel %vm166, %v155, 0
  %v183 = vsel %vm166, %v156, 0
  %v186 = vsel %vm166, %v157, 0
  %v189 = vsel %vm166, %v158, 0
  %191 = vmatprep.subr.mxu0 0.0
  %192 = vmatpush1.msra.mxu0 0.0
  %193 = vmatprep.subr.mxu0 0.0
  %194 = vmatpush1.msra.mxu0 0.0
  %195 = vmatprep.subr.mxu0 0.0
  %196 = vmatpush1.msra.mxu0 0.0
  %197 = vmatprep.subr.mxu0 0.0
  %198 = vmatpush1.msra.mxu0 0.0
  %199 = vmatprep.subr.mxu0 0.0
  %200 = vmatpush1.msra.mxu0 0.0
  %201 = vmatprep.subr.mxu0 0.0
  %202 = vmatpush1.msra.mxu0 0.0
  %203 = vmatprep.subr.mxu0 0.0
  %204 = vmatpush1.msra.mxu0 0.0
  %205 = vmatprep.subr.mxu0 0.0
  %206 = vmatpush1.msra.mxu0 0.0
  %207 = vmatprep.subr.mxu0 0.0
  %208 = vmatpush1.msra.mxu0 0.0
  %209 = vmatprep.subr.mxu0 0.0
  %210 = vmatpush1.msra.mxu0 0.0
  %211 = vmatprep.subr.mxu0 0.0
  %212 = vmatpush1.msra.mxu0 0.0
  %213 = vmatprep.subr.mxu0 0.0
  %214 = vmatpush1.msra.mxu0 0.0
  %215 = vmatprep.subr.mxu0 0.0
  %216 = vmatpush1.msra.mxu0 0.0
  %217 = vmatprep.subr.mxu0 0.0
  %218 = vmatpush1.msra.mxu0 0.0
  %219 = vmatprep.subr.mxu0 0.0
  %220 = vmatpush1.msra.mxu0 %v160
  %221 = vmatprep.subr.mxu0 0.0
  %222 = vmatpush1.msra.mxu0 %v159
  %223 = vmatprep.subr.mxu0 0.0
  %224 = vmatpush2.msra.mxu0 0.0
  %225 = vmatprep.subr.mxu0 0.0
  %226 = vmatpush2.msra.mxu0 0.0
  %227 = vmatprep.subr.mxu0 0.0
  %228 = vmatpush2.msra.mxu0 0.0
  %229 = vmatprep.subr.mxu0 0.0
  %230 = vmatpush2.msra.mxu0 0.0
  %231 = vmatprep.subr.mxu0 0.0
  %232 = vmatpush2.msra.mxu0 0.0
  %233 = vmatprep.subr.mxu0 0.0
  %234 = vmatpush2.msra.mxu0 0.0
  %235 = vmatprep.subr.mxu0 0.0
  %236 = vmatpush2.msra.mxu0 0.0
  %237 = vmatprep.subr.mxu0 0.0
  %238 = vmatpush2.msra.mxu0 0.0
  %239 = vmatprep.subr.mxu0 0.0
  %240 = vmatpush2.msra.mxu0 0.0
  %241 = vmatprep.subr.mxu0 0.0
  %242 = vmatpush2.msra.mxu0 0.0
  %243 = vmatprep.subr.mxu0 0.0
  %244 = vmatpush2.msra.mxu0 0.0
  %245 = vmatprep.subr.mxu0 0.0
  %246 = vmatpush2.msra.mxu0 0.0
  %247 = vmatprep.subr.mxu0 0.0
  %248 = vmatpush2.msra.mxu0 0.0
  %249 = vmatprep.subr.mxu0 0.0
  %250 = vmatpush2.msra.mxu0 0.0
  %251 = vmatprep.subr.mxu0 0.0
  %252 = vmatpush2.msra.mxu0 0.0
  %253 = vmatprep.subr.mxu0 0.0
  %254 = vmatpush2.msra.mxu0 0.0
  %255 = vmatprep.mubr.f32.mxu0 0.0
  %256 = vmatmul.mubr.f32.gmra.mxu0 %v168
  %v257 = vpop.f32.mrf.mxu0
  %v258 = vadd.f32 %v165, %v257
  %v259 = vpop.f32.mrf.mxu0
  %260 = vmatprep.mubr.f32.mxu0 0.0
  %261 = vmatmul.mubr.f32.gmra.mxu0 %v171
  %v262 = vpop.f32.mrf.mxu0
  %v263 = vadd.f32 %v165, %v262
  %v264 = vpop.f32.mrf.mxu0
  %265 = vmatprep.mubr.f32.mxu0 0.0
  %266 = vmatmul.mubr.f32.gmra.mxu0 %v174
  %v267 = vpop.f32.mrf.mxu0
  %v268 = vadd.f32 %v165, %v267
  %v269 = vpop.f32.mrf.mxu0
  %270 = vmatprep.mubr.f32.mxu0 0.0
  %271 = vmatmul.mubr.f32.gmra.mxu0 %v177
  %v272 = vpop.f32.mrf.mxu0
  %v273 = vadd.f32 %v165, %v272
  %v274 = vpop.f32.mrf.mxu0
  %275 = vmatprep.mubr.f32.mxu0 0.0
  %276 = vmatmul.mubr.f32.gmra.mxu0 %v180
  %v277 = vpop.f32.mrf.mxu0
  %v278 = vadd.f32 %v165, %v277
  %v279 = vpop.f32.mrf.mxu0
  %280 = vmatprep.mubr.f32.mxu0 0.0
  %281 = vmatmul.mubr.f32.gmra.mxu0 %v183
  %v282 = vpop.f32.mrf.mxu0
  %v283 = vadd.f32 %v165, %v282
  %v284 = vpop.f32.mrf.mxu0
  %285 = vmatprep.mubr.f32.mxu0 0.0
  %286 = vmatmul.mubr.f32.gmra.mxu0 %v186
  %v287 = vpop.f32.mrf.mxu0
  %v288 = vadd.f32 %v165, %v287
  %v289 = vpop.f32.mrf.mxu0
  %290 = vmatprep.mubr.f32.mxu0 0.0
  %291 = vmatmul.mubr.f32.gmra.mxu0 %v189
  %v292 = vpop.f32.mrf.mxu0
  %v293 = vadd.f32 %v165, %v292
  %v294 = vpop.f32.mrf.mxu0
  %295 = vdwg.mxu0
  %v296 = vmax.f32 %v258, 0.0
  %v297 = vmax.f32 %v263, 0.0
  %v298 = vmax.f32 %v268, 0.0
  %v299 = vmax.f32 %v273, 0.0
  %v300 = vmax.f32 %v278, 0.0
  %v301 = vmax.f32 %v283, 0.0
  %v302 = vmax.f32 %v288, 0.0
  %v303 = vmax.f32 %v293, 0.0
  %v304 = vld [vmem:[%s5 + $0x10] sm:$0xff]
  %v305 = vld [vmem:[%s5 + $0x18] sm:$0xff]
  %v306 = vld [vmem:[%s5 + $0x20] sm:$0xff]
  %v307 = vld [vmem:[%s5 + $0x28] sm:$0xff]
  %v308 = vld [vmem:[%s7 + $0x1] sm:$0x1]
  %v309 = vlaneseq
  %v310 = vshrl.u32 %v309, 7
  %v311 = vsub.s32 0, %v310
  %v312 = vrot.slane %v308, %v311
  %vm313 = vcmask 261120
  %v315 = vsel %vm313, %v296, 0
  %v318 = vsel %vm313, %v297, 0
  %v321 = vsel %vm313, %v298, 0
  %v324 = vsel %vm313, %v299, 0
  %v327 = vsel %vm313, %v300, 0
  %v330 = vsel %vm313, %v301, 0
  %v333 = vsel %vm313, %v302, 0
  %v336 = vsel %vm313, %v303, 0
  %338 = vmatprep.subr.mxu0 0.0
  %339 = vmatpush1.msra.mxu0 0.0
  %340 = vmatprep.subr.mxu0 0.0
  %341 = vmatpush1.msra.mxu0 0.0
  %342 = vmatprep.subr.mxu0 0.0
  %343 = vmatpush1.msra.mxu0 0.0
  %344 = vmatprep.subr.mxu0 0.0
  %345 = vmatpush1.msra.mxu0 0.0
  %346 = vmatprep.subr.mxu0 0.0
  %347 = vmatpush1.msra.mxu0 0.0
  %348 = vmatprep.subr.mxu0 0.0
  %349 = vmatpush1.msra.mxu0 0.0
  %350 = vmatprep.subr.mxu0 0.0
  %351 = vmatpush1.msra.mxu0 0.0
  %352 = vmatprep.subr.mxu0 0.0
  %353 = vmatpush1.msra.mxu0 0.0
  %354 = vmatprep.subr.mxu0 0.0
  %355 = vmatpush1.msra.mxu0 0.0
  %356 = vmatprep.subr.mxu0 0.0
  %357 = vmatpush1.msra.mxu0 0.0
  %358 = vmatprep.subr.mxu0 0.0
  %359 = vmatpush1.msra.mxu0 0.0
  %360 = vmatprep.subr.mxu0 0.0
  %361 = vmatpush1.msra.mxu0 0.0
  %362 = vmatprep.subr.mxu0 0.0
  %363 = vmatpush1.msra.mxu0 %v307
  %364 = vmatprep.subr.mxu0 0.0
  %365 = vmatpush1.msra.mxu0 %v306
  %366 = vmatprep.subr.mxu0 0.0
  %367 = vmatpush1.msra.mxu0 %v305
  %368 = vmatprep.subr.mxu0 0.0
  %369 = vmatpush1.msra.mxu0 %v304
  %370 = vmatprep.subr.mxu0 0.0
  %371 = vmatpush2.msra.mxu0 0.0
  %372 = vmatprep.subr.mxu0 0.0
  %373 = vmatpush2.msra.mxu0 0.0
  %374 = vmatprep.subr.mxu0 0.0
  %375 = vmatpush2.msra.mxu0 0.0
  %376 = vmatprep.subr.mxu0 0.0
  %377 = vmatpush2.msra.mxu0 0.0
  %378 = vmatprep.subr.mxu0 0.0
  %379 = vmatpush2.msra.mxu0 0.0
  %380 = vmatprep.subr.mxu0 0.0
  %381 = vmatpush2.msra.mxu0 0.0
  %382 = vmatprep.subr.mxu0 0.0
  %383 = vmatpush2.msra.mxu0 0.0
  %384 = vmatprep.subr.mxu0 0.0
  %385 = vmatpush2.msra.mxu0 0.0
  %386 = vmatprep.subr.mxu0 0.0
  %387 = vmatpush2.msra.mxu0 0.0
  %388 = vmatprep.subr.mxu0 0.0
  %389 = vmatpush2.msra.mxu0 0.0
  %390 = vmatprep.subr.mxu0 0.0
  %391 = vmatpush2.msra.mxu0 0.0
  %392 = vmatprep.subr.mxu0 0.0
  %393 = vmatpush2.msra.mxu0 0.0
  %394 = vmatprep.subr.mxu0 0.0
  %395 = vmatpush2.msra.mxu0 0.0
  %396 = vmatprep.subr.mxu0 0.0
  %397 = vmatpush2.msra.mxu0 0.0
  %398 = vmatprep.subr.mxu0 0.0
  %399 = vmatpush2.msra.mxu0 0.0
  %400 = vmatprep.subr.mxu0 0.0
  %401 = vmatpush2.msra.mxu0 0.0
  %402 = vmatprep.mubr.f32.mxu0 0.0
  %403 = vmatmul.mubr.f32.gmra.mxu0 %v315
  %v404 = vpop.f32.mrf.mxu0
  %v405 = vadd.f32 %v312, %v404
  %v406 = vpop.f32.mrf.mxu0
  %407 = vmatprep.mubr.f32.mxu0 0.0
  %408 = vmatmul.mubr.f32.gmra.mxu0 %v318
  %v409 = vpop.f32.mrf.mxu0
  %v410 = vadd.f32 %v312, %v409
  %v411 = vpop.f32.mrf.mxu0
  %412 = vmatprep.mubr.f32.mxu0 0.0
  %413 = vmatmul.mubr.f32.gmra.mxu0 %v321
  %v414 = vpop.f32.mrf.mxu0
  %v415 = vadd.f32 %v312, %v414
  %v416 = vpop.f32.mrf.mxu0
  %417 = vmatprep.mubr.f32.mxu0 0.0
  %418 = vmatmul.mubr.f32.gmra.mxu0 %v324
  %v419 = vpop.f32.mrf.mxu0
  %v420 = vadd.f32 %v312, %v419
  %v421 = vpop.f32.mrf.mxu0
  %422 = vmatprep.mubr.f32.mxu0 0.0
  %423 = vmatmul.mubr.f32.gmra.mxu0 %v327
  %v424 = vpop.f32.mrf.mxu0
  %v425 = vadd.f32 %v312, %v424
  %v426 = vpop.f32.mrf.mxu0
  %427 = vmatprep.mubr.f32.mxu0 0.0
  %428 = vmatmul.mubr.f32.gmra.mxu0 %v330
  %v429 = vpop.f32.mrf.mxu0
  %v430 = vadd.f32 %v312, %v429
  %v431 = vpop.f32.mrf.mxu0
  %432 = vmatprep.mubr.f32.mxu0 0.0
  %433 = vmatmul.mubr.f32.gmra.mxu0 %v333
  %v434 = vpop.f32.mrf.mxu0
  %v435 = vadd.f32 %v312, %v434
  %v436 = vpop.f32.mrf.mxu0
  %437 = vmatprep.mubr.f32.mxu0 0.0
  %438 = vmatmul.mubr.f32.gmra.mxu0 %v336
  %v439 = vpop.f32.mrf.mxu0
  %v440 = vadd.f32 %v312, %v439
  %v441 = vpop.f32.mrf.mxu0
  %442 = vdwg.mxu0
  %v443 = vmax.f32 %v405, 0.0
  %v444 = vmax.f32 %v410, 0.0
  %v445 = vmax.f32 %v415, 0.0
  %v446 = vmax.f32 %v420, 0.0
  %v447 = vmax.f32 %v425, 0.0
  %v448 = vmax.f32 %v430, 0.0
  %v449 = vmax.f32 %v435, 0.0
  %v450 = vmax.f32 %v440, 0.0
  %v451 = vld [vmem:[%s6] sm:$0xff]
  %v452 = vld [vmem:[%s6 + $0x8] sm:$0xff]
  %v453 = vld [vmem:[%s6 + $0x10] sm:$0xff]
  %v454 = vld [vmem:[%s6 + $0x18] sm:$0xff]
  %v455 = vld [vmem:[%s6 + $0x20] sm:$0xff]
  %v456 = vld [vmem:[%s6 + $0x28] sm:$0xff]
  %v457 = vld [vmem:[%s6 + $0x30] sm:$0xff]
  %v458 = vld [vmem:[%s6 + $0x38] sm:$0xff]
  %v459 = vld [vmem:[%s7 + $0x2] sm:$0x1]
  %v460 = vlaneseq
  %v461 = vshrl.u32 %v460, 7
  %v462 = vsub.s32 0, %v461
  %v463 = vrot.slane %v459, %v462
  %vm464 = vcmask 523264
  %v466 = vsel %vm464, %v443, 0
  %v469 = vsel %vm464, %v444, 0
  %v472 = vsel %vm464, %v445, 0
  %v475 = vsel %vm464, %v446, 0
  %v478 = vsel %vm464, %v447, 0
  %v481 = vsel %vm464, %v448, 0
  %v484 = vsel %vm464, %v449, 0
  %v487 = vsel %vm464, %v450, 0
  %489 = vmatprep.subr.mxu0 0.0
  %490 = vmatpush1.msra.mxu0 0.0
  %491 = vmatprep.subr.mxu0 0.0
  %492 = vmatpush1.msra.mxu0 0.0
  %493 = vmatprep.subr.mxu0 0.0
  %494 = vmatpush1.msra.mxu0 0.0
  %495 = vmatprep.subr.mxu0 0.0
  %496 = vmatpush1.msra.mxu0 0.0
  %497 = vmatprep.subr.mxu0 0.0
  %498 = vmatpush1.msra.mxu0 0.0
  %499 = vmatprep.subr.mxu0 0.0
  %500 = vmatpush1.msra.mxu0 0.0
  %501 = vmatprep.subr.mxu0 0.0
  %502 = vmatpush1.msra.mxu0 0.0
  %503 = vmatprep.subr.mxu0 0.0
  %504 = vmatpush1.msra.mxu0 0.0
  %505 = vmatprep.subr.mxu0 0.0
  %506 = vmatpush1.msra.mxu0 %v458
  %507 = vmatprep.subr.mxu0 0.0
  %508 = vmatpush1.msra.mxu0 %v457
  %509 = vmatprep.subr.mxu0 0.0
  %510 = vmatpush1.msra.mxu0 %v456
  %511 = vmatprep.subr.mxu0 0.0
  %512 = vmatpush1.msra.mxu0 %v455
  %513 = vmatprep.subr.mxu0 0.0
  %514 = vmatpush1.msra.mxu0 %v454
  %515 = vmatprep.subr.mxu0 0.0
  %516 = vmatpush1.msra.mxu0 %v453
  %517 = vmatprep.subr.mxu0 0.0
  %518 = vmatpush1.msra.mxu0 %v452
  %519 = vmatprep.subr.mxu0 0.0
  %520 = vmatpush1.msra.mxu0 %v451
  %521 = vmatprep.subr.mxu0 0.0
  %522 = vmatpush2.msra.mxu0 0.0
  %523 = vmatprep.subr.mxu0 0.0
  %524 = vmatpush2.msra.mxu0 0.0
  %525 = vmatprep.subr.mxu0 0.0
  %526 = vmatpush2.msra.mxu0 0.0
  %527 = vmatprep.subr.mxu0 0.0
  %528 = vmatpush2.msra.mxu0 0.0
  %529 = vmatprep.subr.mxu0 0.0
  %530 = vmatpush2.msra.mxu0 0.0
  %531 = vmatprep.subr.mxu0 0.0
  %532 = vmatpush2.msra.mxu0 0.0
  %533 = vmatprep.subr.mxu0 0.0
  %534 = vmatpush2.msra.mxu0 0.0
  %535 = vmatprep.subr.mxu0 0.0
  %536 = vmatpush2.msra.mxu0 0.0
  %537 = vmatprep.subr.mxu0 0.0
  %538 = vmatpush2.msra.mxu0 0.0
  %539 = vmatprep.subr.mxu0 0.0
  %540 = vmatpush2.msra.mxu0 0.0
  %541 = vmatprep.subr.mxu0 0.0
  %542 = vmatpush2.msra.mxu0 0.0
  %543 = vmatprep.subr.mxu0 0.0
  %544 = vmatpush2.msra.mxu0 0.0
  %545 = vmatprep.subr.mxu0 0.0
  %546 = vmatpush2.msra.mxu0 0.0
  %547 = vmatprep.subr.mxu0 0.0
  %548 = vmatpush2.msra.mxu0 0.0
  %549 = vmatprep.subr.mxu0 0.0
  %550 = vmatpush2.msra.mxu0 0.0
  %551 = vmatprep.subr.mxu0 0.0
  %552 = vmatpush2.msra.mxu0 0.0
  %553 = vmatprep.mubr.f32.mxu0 0.0
  %554 = vmatmul.mubr.f32.gmra.mxu0 %v466
  %v555 = vpop.f32.mrf.mxu0
  %v556 = vadd.f32 %v463, %v555
  %v557 = vpop.f32.mrf.mxu0
  %558 = vmatprep.mubr.f32.mxu0 0.0
  %559 = vmatmul.mubr.f32.gmra.mxu0 %v469
  %v560 = vpop.f32.mrf.mxu0
  %v561 = vadd.f32 %v463, %v560
  %v562 = vpop.f32.mrf.mxu0
  %563 = vmatprep.mubr.f32.mxu0 0.0
  %564 = vmatmul.mubr.f32.gmra.mxu0 %v472
  %v565 = vpop.f32.mrf.mxu0
  %v566 = vadd.f32 %v463, %v565
  %v567 = vpop.f32.mrf.mxu0
  %568 = vmatprep.mubr.f32.mxu0 0.0
  %569 = vmatmul.mubr.f32.gmra.mxu0 %v475
  %v570 = vpop.f32.mrf.mxu0
  %v571 = vadd.f32 %v463, %v570
  %v572 = vpop.f32.mrf.mxu0
  %573 = vmatprep.mubr.f32.mxu0 0.0
  %574 = vmatmul.mubr.f32.gmra.mxu0 %v478
  %v575 = vpop.f32.mrf.mxu0
  %v576 = vadd.f32 %v463, %v575
  %v577 = vpop.f32.mrf.mxu0
  %578 = vmatprep.mubr.f32.mxu0 0.0
  %579 = vmatmul.mubr.f32.gmra.mxu0 %v481
  %v580 = vpop.f32.mrf.mxu0
  %v581 = vadd.f32 %v463, %v580
  %v582 = vpop.f32.mrf.mxu0
  %583 = vmatprep.mubr.f32.mxu0 0.0
  %584 = vmatmul.mubr.f32.gmra.mxu0 %v484
  %v585 = vpop.f32.mrf.mxu0
  %v586 = vadd.f32 %v463, %v585
  %v587 = vpop.f32.mrf.mxu0
  %588 = vmatprep.mubr.f32.mxu0 0.0
  %589 = vmatmul.mubr.f32.gmra.mxu0 %v487
  %v590 = vpop.f32.mrf.mxu0
  %v591 = vadd.f32 %v463, %v590
  %v592 = vpop.f32.mrf.mxu0
  %593 = vdwg.mxu0
  %v594 = vmax.f32 %v556, 0.0
  %v595 = vmax.f32 %v561, 0.0
  %v596 = vmax.f32 %v566, 0.0
  %v597 = vmax.f32 %v571, 0.0
  %v598 = vmax.f32 %v576, 0.0
  %v599 = vmax.f32 %v581, 0.0
  %v600 = vmax.f32 %v586, 0.0
  %v601 = vmax.f32 %v591, 0.0
  %v602 = vld [vmem:[%s5 + $0x30] sm:$0xff]
  %v604 = vsel %vm464, %v602, 0
  %606 = vmatprep.subr.mxu0 0.0
  %607 = vmatpush1.msra.mxu0 0.0
  %608 = vmatprep.subr.mxu0 0.0
  %609 = vmatpush1.msra.mxu0 0.0
  %610 = vmatprep.subr.mxu0 0.0
  %611 = vmatpush1.msra.mxu0 0.0
  %612 = vmatprep.subr.mxu0 0.0
  %613 = vmatpush1.msra.mxu0 0.0
  %614 = vmatprep.subr.mxu0 0.0
  %615 = vmatpush1.msra.mxu0 0.0
  %616 = vmatprep.subr.mxu0 0.0
  %617 = vmatpush1.msra.mxu0 0.0
  %618 = vmatprep.subr.mxu0 0.0
  %619 = vmatpush1.msra.mxu0 0.0
  %620 = vmatprep.subr.mxu0 0.0
  %621 = vmatpush1.msra.mxu0 0.0
  %622 = vmatprep.subr.mxu0 0.0
  %623 = vmatpush1.msra.mxu0 %v601
  %624 = vmatprep.subr.mxu0 0.0
  %625 = vmatpush1.msra.mxu0 %v600
  %626 = vmatprep.subr.mxu0 0.0
  %627 = vmatpush1.msra.mxu0 %v599
  %628 = vmatprep.subr.mxu0 0.0
  %629 = vmatpush1.msra.mxu0 %v598
  %630 = vmatprep.subr.mxu0 0.0
  %631 = vmatpush1.msra.mxu0 %v597
  %632 = vmatprep.subr.mxu0 0.0
  %633 = vmatpush1.msra.mxu0 %v596
  %634 = vmatprep.subr.mxu0 0.0
  %635 = vmatpush1.msra.mxu0 %v595
  %636 = vmatprep.subr.mxu0 0.0
  %637 = vmatpush1.msra.mxu0 %v594
  %638 = vmatprep.subr.mxu0 0.0
  %639 = vmatpush2.msra.mxu0 0.0
  %640 = vmatprep.subr.mxu0 0.0
  %641 = vmatpush2.msra.mxu0 0.0
  %642 = vmatprep.subr.mxu0 0.0
  %643 = vmatpush2.msra.mxu0 0.0
  %644 = vmatprep.subr.mxu0 0.0
  %645 = vmatpush2.msra.mxu0 0.0
  %646 = vmatprep.subr.mxu0 0.0
  %647 = vmatpush2.msra.mxu0 0.0
  %648 = vmatprep.subr.mxu0 0.0
  %649 = vmatpush2.msra.mxu0 0.0
  %650 = vmatprep.subr.mxu0 0.0
  %651 = vmatpush2.msra.mxu0 0.0
  %652 = vmatprep.subr.mxu0 0.0
  %653 = vmatpush2.msra.mxu0 0.0
  %654 = vmatprep.subr.mxu0 0.0
  %655 = vmatpush2.msra.mxu0 0.0
  %656 = vmatprep.subr.mxu0 0.0
  %657 = vmatpush2.msra.mxu0 0.0
  %658 = vmatprep.subr.mxu0 0.0
  %659 = vmatpush2.msra.mxu0 0.0
  %660 = vmatprep.subr.mxu0 0.0
  %661 = vmatpush2.msra.mxu0 0.0
  %662 = vmatprep.subr.mxu0 0.0
  %663 = vmatpush2.msra.mxu0 0.0
  %664 = vmatprep.subr.mxu0 0.0
  %665 = vmatpush2.msra.mxu0 0.0
  %666 = vmatprep.subr.mxu0 0.0
  %667 = vmatpush2.msra.mxu0 0.0
  %668 = vmatprep.subr.mxu0 0.0
  %669 = vmatpush2.msra.mxu0 0.0
  %670 = vmatprep.mubr.f32.mxu0 0.0
  %671 = vmatmul.mubr.f32.gmra.mxu0 %v604
  %v672 = vpop.f32.mrf.mxu0
  %v673 = vadd.f32 0.0, %v672
  %v674 = vpop.f32.mrf.mxu0
  %675 = vdwg.mxu0
  %v676 = vld [vmem:[%s5 + $0x38] sm:$0xff]
  %v677 = vld [vmem:[%s5 + $0x40] sm:$0xff]
  %v678 = vld [vmem:[%s5 + $0x48] sm:$0xff]
  %v679 = vld [vmem:[%s5 + $0x50] sm:$0xff]
  %v680 = vld [vmem:[%s5 + $0x58] sm:$0xff]
  %v681 = vld [vmem:[%s5 + $0x60] sm:$0xff]
  %v682 = vld [vmem:[%s5 + $0x68] sm:$0xff]
  %v683 = vld [vmem:[%s5 + $0x70] sm:$0xff]
  %v684 = vld [vmem:[%s5 + $0x78] sm:$0xff]
  %v685 = vld [vmem:[%s5 + $0x80] sm:$0xff]
  %v686 = vld [vmem:[%s5 + $0x88] sm:$0xff]
  %v687 = vld [vmem:[%s5 + $0x90] sm:$0xff]
  %v688 = vld [vmem:[%s5 + $0x98] sm:$0xff]
  %v689 = vld [vmem:[%s5 + $0xa0] sm:$0xff]
  %v690 = vld [vmem:[%s5 + $0xa8] sm:$0xff]
  %v691 = vld [vmem:[%s5 + $0xb0] sm:$0xff]
  %v692 = vld [vmem:[%s7 + $0x3] sm:$0x1]
  %v693 = vlaneseq
  %v694 = vshrl.u32 %v693, 7
  %v695 = vsub.s32 0, %v694
  %v696 = vrot.slane %v692, %v695
  %697 = vmatprep.subr.mxu0 0.0
  %698 = vmatpush1.msra.mxu0 %v691
  %699 = vmatprep.subr.mxu0 0.0
  %700 = vmatpush1.msra.mxu0 %v690
  %701 = vmatprep.subr.mxu0 0.0
  %702 = vmatpush1.msra.mxu0 %v689
  %703 = vmatprep.subr.mxu0 0.0
  %704 = vmatpush1.msra.mxu0 %v688
  %705 = vmatprep.subr.mxu0 0.0
  %706 = vmatpush1.msra.mxu0 %v687
  %707 = vmatprep.subr.mxu0 0.0
  %708 = vmatpush1.msra.mxu0 %v686
  %709 = vmatprep.subr.mxu0 0.0
  %710 = vmatpush1.msra.mxu0 %v685
  %711 = vmatprep.subr.mxu0 0.0
  %712 = vmatpush1.msra.mxu0 %v684
  %713 = vmatprep.subr.mxu0 0.0
  %714 = vmatpush1.msra.mxu0 %v683
  %715 = vmatprep.subr.mxu0 0.0
  %716 = vmatpush1.msra.mxu0 %v682
  %717 = vmatprep.subr.mxu0 0.0
  %718 = vmatpush1.msra.mxu0 %v681
  %719 = vmatprep.subr.mxu0 0.0
  %720 = vmatpush1.msra.mxu0 %v680
  %721 = vmatprep.subr.mxu0 0.0
  %722 = vmatpush1.msra.mxu0 %v679
  %723 = vmatprep.subr.mxu0 0.0
  %724 = vmatpush1.msra.mxu0 %v678
  %725 = vmatprep.subr.mxu0 0.0
  %726 = vmatpush1.msra.mxu0 %v677
  %727 = vmatprep.subr.mxu0 0.0
  %728 = vmatpush1.msra.mxu0 %v676
  %729 = vmatprep.subr.mxu0 0.0
  %730 = vmatpush2.msra.mxu0 0.0
  %731 = vmatprep.subr.mxu0 0.0
  %732 = vmatpush2.msra.mxu0 0.0
  %733 = vmatprep.subr.mxu0 0.0
  %734 = vmatpush2.msra.mxu0 0.0
  %735 = vmatprep.subr.mxu0 0.0
  %736 = vmatpush2.msra.mxu0 0.0
  %737 = vmatprep.subr.mxu0 0.0
  %738 = vmatpush2.msra.mxu0 0.0
  %739 = vmatprep.subr.mxu0 0.0
  %740 = vmatpush2.msra.mxu0 0.0
  %741 = vmatprep.subr.mxu0 0.0
  %742 = vmatpush2.msra.mxu0 0.0
  %743 = vmatprep.subr.mxu0 0.0
  %744 = vmatpush2.msra.mxu0 0.0
  %745 = vmatprep.subr.mxu0 0.0
  %746 = vmatpush2.msra.mxu0 0.0
  %747 = vmatprep.subr.mxu0 0.0
  %748 = vmatpush2.msra.mxu0 0.0
  %749 = vmatprep.subr.mxu0 0.0
  %750 = vmatpush2.msra.mxu0 0.0
  %751 = vmatprep.subr.mxu0 0.0
  %752 = vmatpush2.msra.mxu0 0.0
  %753 = vmatprep.subr.mxu0 0.0
  %754 = vmatpush2.msra.mxu0 0.0
  %755 = vmatprep.subr.mxu0 0.0
  %756 = vmatpush2.msra.mxu0 0.0
  %757 = vmatprep.subr.mxu0 0.0
  %758 = vmatpush2.msra.mxu0 0.0
  %759 = vmatprep.subr.mxu0 0.0
  %760 = vmatpush2.msra.mxu0 0.0
  %761 = vmatprep.mubr.f32.mxu0 0.0
  %762 = vmatmul.mubr.f32.gmra.mxu0 %v673
  %v763 = vpop.f32.mrf.mxu0
  %v764 = vadd.f32 %v696, %v763
  %v765 = vpop.f32.mrf.mxu0
  %766 = vdwg.mxu0
  %v767 = vmax.f32 %v764, 0.0
  %v768 = vld [vmem:[%s5 + $0xb8] sm:$0xff]
  %v769 = vld [vmem:[%s5 + $0xc0] sm:$0xff]
  %v770 = vld [vmem:[%s5 + $0xc8] sm:$0xff]
  %v771 = vld [vmem:[%s5 + $0xd0] sm:$0xff]
  %v772 = vld [vmem:[%s5 + $0xd8] sm:$0xff]
  %v773 = vld [vmem:[%s5 + $0xe0] sm:$0xff]
  %v774 = vld [vmem:[%s5 + $0xe8] sm:$0xff]
  %v775 = vld [vmem:[%s5 + $0xf0] sm:$0xff]
  %v776 = vld [vmem:[%s7 + $0x4] sm:$0x1]
  %v777 = vlaneseq
  %v778 = vshrl.u32 %v777, 7
  %v779 = vsub.s32 0, %v778
  %v780 = vrot.slane %v776, %v779
  %v782 = vsel %vm464, %v767, 0
  %784 = vmatprep.subr.mxu0 0.0
  %785 = vmatpush1.msra.mxu0 0.0
  %786 = vmatprep.subr.mxu0 0.0
  %787 = vmatpush1.msra.mxu0 0.0
  %788 = vmatprep.subr.mxu0 0.0
  %789 = vmatpush1.msra.mxu0 0.0
  %790 = vmatprep.subr.mxu0 0.0
  %791 = vmatpush1.msra.mxu0 0.0
  %792 = vmatprep.subr.mxu0 0.0
  %793 = vmatpush1.msra.mxu0 0.0
  %794 = vmatprep.subr.mxu0 0.0
  %795 = vmatpush1.msra.mxu0 0.0
  %796 = vmatprep.subr.mxu0 0.0
  %797 = vmatpush1.msra.mxu0 0.0
  %798 = vmatprep.subr.mxu0 0.0
  %799 = vmatpush1.msra.mxu0 0.0
  %800 = vmatprep.subr.mxu0 0.0
  %801 = vmatpush1.msra.mxu0 %v775
  %802 = vmatprep.subr.mxu0 0.0
  %803 = vmatpush1.msra.mxu0 %v774
  %804 = vmatprep.subr.mxu0 0.0
  %805 = vmatpush1.msra.mxu0 %v773
  %806 = vmatprep.subr.mxu0 0.0
  %807 = vmatpush1.msra.mxu0 %v772
  %808 = vmatprep.subr.mxu0 0.0
  %809 = vmatpush1.msra.mxu0 %v771
  %810 = vmatprep.subr.mxu0 0.0
  %811 = vmatpush1.msra.mxu0 %v770
  %812 = vmatprep.subr.mxu0 0.0
  %813 = vmatpush1.msra.mxu0 %v769
  %814 = vmatprep.subr.mxu0 0.0
  %815 = vmatpush1.msra.mxu0 %v768
  %816 = vmatprep.subr.mxu0 0.0
  %817 = vmatpush2.msra.mxu0 0.0
  %818 = vmatprep.subr.mxu0 0.0
  %819 = vmatpush2.msra.mxu0 0.0
  %820 = vmatprep.subr.mxu0 0.0
  %821 = vmatpush2.msra.mxu0 0.0
  %822 = vmatprep.subr.mxu0 0.0
  %823 = vmatpush2.msra.mxu0 0.0
  %824 = vmatprep.subr.mxu0 0.0
  %825 = vmatpush2.msra.mxu0 0.0
  %826 = vmatprep.subr.mxu0 0.0
  %827 = vmatpush2.msra.mxu0 0.0
  %828 = vmatprep.subr.mxu0 0.0
  %829 = vmatpush2.msra.mxu0 0.0
  %830 = vmatprep.subr.mxu0 0.0
  %831 = vmatpush2.msra.mxu0 0.0
  %832 = vmatprep.subr.mxu0 0.0
  %833 = vmatpush2.msra.mxu0 0.0
  %834 = vmatprep.subr.mxu0 0.0
  %835 = vmatpush2.msra.mxu0 0.0
  %836 = vmatprep.subr.mxu0 0.0
  %837 = vmatpush2.msra.mxu0 0.0
  %838 = vmatprep.subr.mxu0 0.0
  %839 = vmatpush2.msra.mxu0 0.0
  %840 = vmatprep.subr.mxu0 0.0
  %841 = vmatpush2.msra.mxu0 0.0
  %842 = vmatprep.subr.mxu0 0.0
  %843 = vmatpush2.msra.mxu0 0.0
  %844 = vmatprep.subr.mxu0 0.0
  %845 = vmatpush2.msra.mxu0 0.0
  %846 = vmatprep.subr.mxu0 0.0
  %847 = vmatpush2.msra.mxu0 0.0
  %848 = vmatprep.mubr.f32.mxu0 0.0
  %849 = vmatmul.mubr.f32.gmra.mxu0 %v782
  %v850 = vpop.f32.mrf.mxu0
  %v851 = vadd.f32 %v780, %v850
  %v852 = vpop.f32.mrf.mxu0
  %853 = vdwg.mxu0
  %v854 = vld [vmem:[%s4] sm:$0xff]
  %v855 = vlaneseq
  %v856 = vand.u32 %v855, 127
  %857 = vset.pattern.permute.xlu0 0
  %858 = vperm.xlu0 %857, %v854
  %v859 = vpop.permute.xlu0 %858
  %vm860 = vcmp.eq.s32.totalorder %v856, %v859
  %v861 = vadd.s32 %v854, 12
  %862 = vset.pattern.permute.xlu0 1
  %863 = vperm.xlu0 %862, %v861
  %v864 = vpop.permute.xlu0 %863
  %vm865 = vcmp.eq.s32.totalorder %v856, %v864
  %vm866 = vmor %vm860, %vm865
  %v867 = vadd.s32 %v854, 24
  %868 = vset.pattern.permute.xlu0 2
  %869 = vperm.xlu0 %868, %v867
  %v870 = vpop.permute.xlu0 %869
  %vm871 = vcmp.eq.s32.totalorder %v856, %v870
  %vm872 = vmor %vm866, %vm871
  %v873 = vadd.s32 %v854, 36
  %874 = vset.pattern.permute.xlu0 3
  %875 = vperm.xlu0 %874, %v873
  %v876 = vpop.permute.xlu0 %875
  %vm877 = vcmp.eq.s32.totalorder %v856, %v876
  %vm878 = vmor %vm872, %vm877
  %v879 = vsel %vm878, 1, 0
  %v880 = vcvt.s32.f32 %v879
  %v881 = vld [vmem:[%s3] sm:$0xff]
  %883 = vrot.lane.b32.xlu0 %v881, 48
  %v884 = vpop.permute.xlu0 %883
  %887 = vrot.lane.b32.xlu0 %v851, 51
  %v888 = vpop.permute.xlu0 %887
  %vm890 = vcmask 392192
  %v891 = vsel %vm890, %v880, %v884
  %vm892 = vcmask 416768
  %v893 = vsel %vm892, %v891, %v888
  %vm894 = vcmask 498688
  %v895 = vsel %vm894, %v893, 1.0
  %vm896 = vcmask 506880
  %v897 = vsel %vm896, %v895, 0.0
  %v898 = vld [vmem:[%s5 + $0xf8] sm:$0xff]
  %v899 = vld [vmem:[%s5 + $0x100] sm:$0xff]
  %v900 = vld [vmem:[%s5 + $0x108] sm:$0xff]
  %v901 = vld [vmem:[%s5 + $0x110] sm:$0xff]
  %v902 = vld [vmem:[%s5 + $0x118] sm:$0xff]
  %v903 = vld [vmem:[%s5 + $0x120] sm:$0xff]
  %v904 = vld [vmem:[%s5 + $0x128] sm:$0xff]
  %v905 = vld [vmem:[%s5 + $0x130] sm:$0xff]
  %v907 = vsel %vm464, %v897, 0
  %909 = vmatprep.subr.mxu0 0.0
  %910 = vmatpush1.msra.mxu0 0.0
  %911 = vmatprep.subr.mxu0 0.0
  %912 = vmatpush1.msra.mxu0 0.0
  %913 = vmatprep.subr.mxu0 0.0
  %914 = vmatpush1.msra.mxu0 0.0
  %915 = vmatprep.subr.mxu0 0.0
  %916 = vmatpush1.msra.mxu0 0.0
  %917 = vmatprep.subr.mxu0 0.0
  %918 = vmatpush1.msra.mxu0 0.0
  %919 = vmatprep.subr.mxu0 0.0
  %920 = vmatpush1.msra.mxu0 0.0
  %921 = vmatprep.subr.mxu0 0.0
  %922 = vmatpush1.msra.mxu0 0.0
  %923 = vmatprep.subr.mxu0 0.0
  %924 = vmatpush1.msra.mxu0 0.0
  %925 = vmatprep.subr.mxu0 0.0
  %926 = vmatpush1.msra.mxu0 %v905
  %927 = vmatprep.subr.mxu0 0.0
  %928 = vmatpush1.msra.mxu0 %v904
  %929 = vmatprep.subr.mxu0 0.0
  %930 = vmatpush1.msra.mxu0 %v903
  %931 = vmatprep.subr.mxu0 0.0
  %932 = vmatpush1.msra.mxu0 %v902
  %933 = vmatprep.subr.mxu0 0.0
  %934 = vmatpush1.msra.mxu0 %v901
  %935 = vmatprep.subr.mxu0 0.0
  %936 = vmatpush1.msra.mxu0 %v900
  %937 = vmatprep.subr.mxu0 0.0
  %938 = vmatpush1.msra.mxu0 %v899
  %939 = vmatprep.subr.mxu0 0.0
  %940 = vmatpush1.msra.mxu0 %v898
  %941 = vmatprep.subr.mxu0 0.0
  %942 = vmatpush2.msra.mxu0 0.0
  %943 = vmatprep.subr.mxu0 0.0
  %944 = vmatpush2.msra.mxu0 0.0
  %945 = vmatprep.subr.mxu0 0.0
  %946 = vmatpush2.msra.mxu0 0.0
  %947 = vmatprep.subr.mxu0 0.0
  %948 = vmatpush2.msra.mxu0 0.0
  %949 = vmatprep.subr.mxu0 0.0
  %950 = vmatpush2.msra.mxu0 0.0
  %951 = vmatprep.subr.mxu0 0.0
  %952 = vmatpush2.msra.mxu0 0.0
  %953 = vmatprep.subr.mxu0 0.0
  %954 = vmatpush2.msra.mxu0 0.0
  %955 = vmatprep.subr.mxu0 0.0
  %956 = vmatpush2.msra.mxu0 0.0
  %957 = vmatprep.subr.mxu0 0.0
  %958 = vmatpush2.msra.mxu0 0.0
  %959 = vmatprep.subr.mxu0 0.0
  %960 = vmatpush2.msra.mxu0 0.0
  %961 = vmatprep.subr.mxu0 0.0
  %962 = vmatpush2.msra.mxu0 0.0
  %963 = vmatprep.subr.mxu0 0.0
  %964 = vmatpush2.msra.mxu0 0.0
  %965 = vmatprep.subr.mxu0 0.0
  %966 = vmatpush2.msra.mxu0 0.0
  %967 = vmatprep.subr.mxu0 0.0
  %968 = vmatpush2.msra.mxu0 0.0
  %969 = vmatprep.subr.mxu0 0.0
  %970 = vmatpush2.msra.mxu0 0.0
  %971 = vmatprep.subr.mxu0 0.0
  %972 = vmatpush2.msra.mxu0 0.0
  %973 = vmatprep.mubr.f32.mxu0 0.0
  %974 = vmatmul.mubr.f32.gmra.mxu0 %v907
  %v975 = vpop.f32.mrf.mxu0
  %v976 = vadd.f32 0.0, %v975
  %v977 = vpop.f32.mrf.mxu0
  %978 = vdwg.mxu0
  %v979 = vmul.f32 %v976, %v976
  %981 = vrot.lane.b32.xlu0 %v976, 120
  %v982 = vpop.permute.xlu0 %981
  %v984 = vsub.f32 %v979, %v982
  %986 = vrot.lane.b32.xlu0 %v984, 95
  %v987 = vpop.permute.xlu0 %986
  %vm989 = vcmask 64512
  %v990 = vsel %vm989, %v987, 0.0
  %991 = vadd.xlane.f32.xlu0 %v990
  %v992 = vpop.xlane.xlu0 %991
  %v993 = vmul.f32 %v992, 0.5
  %v994 = vmax.f32 %v976, 0.0
  %v995 = vld [vmem:[%s5 + $0x138] sm:$0xff]
  %v996 = vld [vmem:[%s5 + $0x140] sm:$0xff]
  %v997 = vld [vmem:[%s5 + $0x148] sm:$0xff]
  %v998 = vld [vmem:[%s5 + $0x150] sm:$0xff]
  %v999 = vld [vmem:[%s7 + $0x5] sm:$0x1]
  %v1000 = vlaneseq
  %v1001 = vshrl.u32 %v1000, 7
  %v1002 = vsub.s32 0, %v1001
  %v1003 = vrot.slane %v999, %v1002
  %v1005 = vsel %vm313, %v994, 0
  %1007 = vmatprep.subr.mxu0 0.0
  %1008 = vmatpush1.msra.mxu0 0.0
  %1009 = vmatprep.subr.mxu0 0.0
  %1010 = vmatpush1.msra.mxu0 0.0
  %1011 = vmatprep.subr.mxu0 0.0
  %1012 = vmatpush1.msra.mxu0 0.0
  %1013 = vmatprep.subr.mxu0 0.0
  %1014 = vmatpush1.msra.mxu0 0.0
  %1015 = vmatprep.subr.mxu0 0.0
  %1016 = vmatpush1.msra.mxu0 0.0
  %1017 = vmatprep.subr.mxu0 0.0
  %1018 = vmatpush1.msra.mxu0 0.0
  %1019 = vmatprep.subr.mxu0 0.0
  %1020 = vmatpush1.msra.mxu0 0.0
  %1021 = vmatprep.subr.mxu0 0.0
  %1022 = vmatpush1.msra.mxu0 0.0
  %1023 = vmatprep.subr.mxu0 0.0
  %1024 = vmatpush1.msra.mxu0 0.0
  %1025 = vmatprep.subr.mxu0 0.0
  %1026 = vmatpush1.msra.mxu0 0.0
  %1027 = vmatprep.subr.mxu0 0.0
  %1028 = vmatpush1.msra.mxu0 0.0
  %1029 = vmatprep.subr.mxu0 0.0
  %1030 = vmatpush1.msra.mxu0 0.0
  %1031 = vmatprep.subr.mxu0 0.0
  %1032 = vmatpush1.msra.mxu0 %v998
  %1033 = vmatprep.subr.mxu0 0.0
  %1034 = vmatpush1.msra.mxu0 %v997
  %1035 = vmatprep.subr.mxu0 0.0
  %1036 = vmatpush1.msra.mxu0 %v996
  %1037 = vmatprep.subr.mxu0 0.0
  %1038 = vmatpush1.msra.mxu0 %v995
  %1039 = vmatprep.subr.mxu0 0.0
  %1040 = vmatpush2.msra.mxu0 0.0
  %1041 = vmatprep.subr.mxu0 0.0
  %1042 = vmatpush2.msra.mxu0 0.0
  %1043 = vmatprep.subr.mxu0 0.0
  %1044 = vmatpush2.msra.mxu0 0.0
  %1045 = vmatprep.subr.mxu0 0.0
  %1046 = vmatpush2.msra.mxu0 0.0
  %1047 = vmatprep.subr.mxu0 0.0
  %1048 = vmatpush2.msra.mxu0 0.0
  %1049 = vmatprep.subr.mxu0 0.0
  %1050 = vmatpush2.msra.mxu0 0.0
  %1051 = vmatprep.subr.mxu0 0.0
  %1052 = vmatpush2.msra.mxu0 0.0
  %1053 = vmatprep.subr.mxu0 0.0
  %1054 = vmatpush2.msra.mxu0 0.0
  %1055 = vmatprep.subr.mxu0 0.0
  %1056 = vmatpush2.msra.mxu0 0.0
  %1057 = vmatprep.subr.mxu0 0.0
  %1058 = vmatpush2.msra.mxu0 0.0
  %1059 = vmatprep.subr.mxu0 0.0
  %1060 = vmatpush2.msra.mxu0 0.0
  %1061 = vmatprep.subr.mxu0 0.0
  %1062 = vmatpush2.msra.mxu0 0.0
  %1063 = vmatprep.subr.mxu0 0.0
  %1064 = vmatpush2.msra.mxu0 0.0
  %1065 = vmatprep.subr.mxu0 0.0
  %1066 = vmatpush2.msra.mxu0 0.0
  %1067 = vmatprep.subr.mxu0 0.0
  %1068 = vmatpush2.msra.mxu0 0.0
  %1069 = vmatprep.subr.mxu0 0.0
  %1070 = vmatpush2.msra.mxu0 0.0
  %1071 = vmatprep.mubr.f32.mxu0 0.0
  %1072 = vmatmul.mubr.f32.gmra.mxu0 %v1005
  %v1073 = vpop.f32.mrf.mxu0
  %v1074 = vadd.f32 %v1003, %v1073
  %v1075 = vpop.f32.mrf.mxu0
  %1076 = vdwg.mxu0
  %v1077 = vmax.f32 %v1074, 0.0
  %v1078 = vld [vmem:[%s5 + $0x158] sm:$0xff]
  %v1079 = vld [vmem:[%s5 + $0x160] sm:$0xff]
  %v1080 = vld [vmem:[%s5 + $0x168] sm:$0xff]
  %v1081 = vld [vmem:[%s5 + $0x170] sm:$0xff]
  %v1082 = vld [vmem:[%s7 + $0x6] sm:$0x1]
  %v1083 = vlaneseq
  %v1084 = vshrl.u32 %v1083, 7
  %v1085 = vsub.s32 0, %v1084
  %v1086 = vrot.slane %v1082, %v1085
  %v1088 = vsel %vm313, %v1077, 0
  %1090 = vmatprep.subr.mxu0 0.0
  %1091 = vmatpush1.msra.mxu0 0.0
  %1092 = vmatprep.subr.mxu0 0.0
  %1093 = vmatpush1.msra.mxu0 0.0
  %1094 = vmatprep.subr.mxu0 0.0
  %1095 = vmatpush1.msra.mxu0 0.0
  %1096 = vmatprep.subr.mxu0 0.0
  %1097 = vmatpush1.msra.mxu0 0.0
  %1098 = vmatprep.subr.mxu0 0.0
  %1099 = vmatpush1.msra.mxu0 0.0
  %1100 = vmatprep.subr.mxu0 0.0
  %1101 = vmatpush1.msra.mxu0 0.0
  %1102 = vmatprep.subr.mxu0 0.0
  %1103 = vmatpush1.msra.mxu0 0.0
  %1104 = vmatprep.subr.mxu0 0.0
  %1105 = vmatpush1.msra.mxu0 0.0
  %1106 = vmatprep.subr.mxu0 0.0
  %1107 = vmatpush1.msra.mxu0 0.0
  %1108 = vmatprep.subr.mxu0 0.0
  %1109 = vmatpush1.msra.mxu0 0.0
  %1110 = vmatprep.subr.mxu0 0.0
  %1111 = vmatpush1.msra.mxu0 0.0
  %1112 = vmatprep.subr.mxu0 0.0
  %1113 = vmatpush1.msra.mxu0 0.0
  %1114 = vmatprep.subr.mxu0 0.0
  %1115 = vmatpush1.msra.mxu0 %v1081
  %1116 = vmatprep.subr.mxu0 0.0
  %1117 = vmatpush1.msra.mxu0 %v1080
  %1118 = vmatprep.subr.mxu0 0.0
  %1119 = vmatpush1.msra.mxu0 %v1079
  %1120 = vmatprep.subr.mxu0 0.0
  %1121 = vmatpush1.msra.mxu0 %v1078
  %1122 = vmatprep.subr.mxu0 0.0
  %1123 = vmatpush2.msra.mxu0 0.0
  %1124 = vmatprep.subr.mxu0 0.0
  %1125 = vmatpush2.msra.mxu0 0.0
  %1126 = vmatprep.subr.mxu0 0.0
  %1127 = vmatpush2.msra.mxu0 0.0
  %1128 = vmatprep.subr.mxu0 0.0
  %1129 = vmatpush2.msra.mxu0 0.0
  %1130 = vmatprep.subr.mxu0 0.0
  %1131 = vmatpush2.msra.mxu0 0.0
  %1132 = vmatprep.subr.mxu0 0.0
  %1133 = vmatpush2.msra.mxu0 0.0
  %1134 = vmatprep.subr.mxu0 0.0
  %1135 = vmatpush2.msra.mxu0 0.0
  %1136 = vmatprep.subr.mxu0 0.0
  %1137 = vmatpush2.msra.mxu0 0.0
  %1138 = vmatprep.subr.mxu0 0.0
  %1139 = vmatpush2.msra.mxu0 0.0
  %1140 = vmatprep.subr.mxu0 0.0
  %1141 = vmatpush2.msra.mxu0 0.0
  %1142 = vmatprep.subr.mxu0 0.0
  %1143 = vmatpush2.msra.mxu0 0.0
  %1144 = vmatprep.subr.mxu0 0.0
  %1145 = vmatpush2.msra.mxu0 0.0
  %1146 = vmatprep.subr.mxu0 0.0
  %1147 = vmatpush2.msra.mxu0 0.0
  %1148 = vmatprep.subr.mxu0 0.0
  %1149 = vmatpush2.msra.mxu0 0.0
  %1150 = vmatprep.subr.mxu0 0.0
  %1151 = vmatpush2.msra.mxu0 0.0
  %1152 = vmatprep.subr.mxu0 0.0
  %1153 = vmatpush2.msra.mxu0 0.0
  %1154 = vmatprep.mubr.f32.mxu0 0.0
  %1155 = vmatmul.mubr.f32.gmra.mxu0 %v1088
  %v1156 = vpop.f32.mrf.mxu0
  %v1157 = vadd.f32 %v1086, %v1156
  %v1158 = vpop.f32.mrf.mxu0
  %1159 = vdwg.mxu0
  %v1160 = vmax.f32 %v1157, 0.0
  %v1161 = vld [vmem:[%s5 + $0x178] sm:$0xff]
  %v1162 = vld [vmem:[%s5 + $0x180] sm:$0xff]
  %v1163 = vld [vmem:[%s7 + $0x7] sm:$0x1]
  %v1164 = vlaneseq
  %v1165 = vshrl.u32 %v1164, 7
  %v1166 = vsub.s32 0, %v1165
  %v1167 = vrot.slane %v1163, %v1166
  %v1169 = vsel %vm166, %v1160, 0
  %1171 = vmatprep.subr.mxu0 0.0
  %1172 = vmatpush1.msra.mxu0 0.0
  %1173 = vmatprep.subr.mxu0 0.0
  %1174 = vmatpush1.msra.mxu0 0.0
  %1175 = vmatprep.subr.mxu0 0.0
  %1176 = vmatpush1.msra.mxu0 0.0
  %1177 = vmatprep.subr.mxu0 0.0
  %1178 = vmatpush1.msra.mxu0 0.0
  %1179 = vmatprep.subr.mxu0 0.0
  %1180 = vmatpush1.msra.mxu0 0.0
  %1181 = vmatprep.subr.mxu0 0.0
  %1182 = vmatpush1.msra.mxu0 0.0
  %1183 = vmatprep.subr.mxu0 0.0
  %1184 = vmatpush1.msra.mxu0 0.0
  %1185 = vmatprep.subr.mxu0 0.0
  %1186 = vmatpush1.msra.mxu0 0.0
  %1187 = vmatprep.subr.mxu0 0.0
  %1188 = vmatpush1.msra.mxu0 0.0
  %1189 = vmatprep.subr.mxu0 0.0
  %1190 = vmatpush1.msra.mxu0 0.0
  %1191 = vmatprep.subr.mxu0 0.0
  %1192 = vmatpush1.msra.mxu0 0.0
  %1193 = vmatprep.subr.mxu0 0.0
  %1194 = vmatpush1.msra.mxu0 0.0
  %1195 = vmatprep.subr.mxu0 0.0
  %1196 = vmatpush1.msra.mxu0 0.0
  %1197 = vmatprep.subr.mxu0 0.0
  %1198 = vmatpush1.msra.mxu0 0.0
  %1199 = vmatprep.subr.mxu0 0.0
  %1200 = vmatpush1.msra.mxu0 %v1162
  %1201 = vmatprep.subr.mxu0 0.0
  %1202 = vmatpush1.msra.mxu0 %v1161
  %1203 = vmatprep.subr.mxu0 0.0
  %1204 = vmatpush2.msra.mxu0 0.0
  %1205 = vmatprep.subr.mxu0 0.0
  %1206 = vmatpush2.msra.mxu0 0.0
  %1207 = vmatprep.subr.mxu0 0.0
  %1208 = vmatpush2.msra.mxu0 0.0
  %1209 = vmatprep.subr.mxu0 0.0
  %1210 = vmatpush2.msra.mxu0 0.0
  %1211 = vmatprep.subr.mxu0 0.0
  %1212 = vmatpush2.msra.mxu0 0.0
  %1213 = vmatprep.subr.mxu0 0.0
  %1214 = vmatpush2.msra.mxu0 0.0
  %1215 = vmatprep.subr.mxu0 0.0
  %1216 = vmatpush2.msra.mxu0 0.0
  %1217 = vmatprep.subr.mxu0 0.0
  %1218 = vmatpush2.msra.mxu0 0.0
  %1219 = vmatprep.subr.mxu0 0.0
  %1220 = vmatpush2.msra.mxu0 0.0
  %1221 = vmatprep.subr.mxu0 0.0
  %1222 = vmatpush2.msra.mxu0 0.0
  %1223 = vmatprep.subr.mxu0 0.0
  %1224 = vmatpush2.msra.mxu0 0.0
  %1225 = vmatprep.subr.mxu0 0.0
  %1226 = vmatpush2.msra.mxu0 0.0
  %1227 = vmatprep.subr.mxu0 0.0
  %1228 = vmatpush2.msra.mxu0 0.0
  %1229 = vmatprep.subr.mxu0 0.0
  %1230 = vmatpush2.msra.mxu0 0.0
  %1231 = vmatprep.subr.mxu0 0.0
  %1232 = vmatpush2.msra.mxu0 0.0
  %1233 = vmatprep.subr.mxu0 0.0
  %1234 = vmatpush2.msra.mxu0 0.0
  %1235 = vmatprep.mubr.f32.mxu0 0.0
  %1236 = vmatmul.mubr.f32.gmra.mxu0 %v1169
  %v1237 = vpop.f32.mrf.mxu0
  %v1238 = vadd.f32 %v1167, %v1237
  %v1239 = vpop.f32.mrf.mxu0
  %1240 = vdwg.mxu0
  %v1241 = vadd.f32 %v976, %v993
  %1243 = vrot.lane.b32.xlu0 %v1238, 32
  %v1244 = vpop.permute.xlu0 %1243
  %v1246 = vadd.f32 %v1241, %v1244
  %1248 = vrot.lane.b32.xlu0 %v1246, 96
  %v1249 = vpop.permute.xlu0 %1248
  %vm1251 = vcmask 7168
  %1252 = vst.msk [vmem:[%s8] sm:$0xff] %vm1251, %v1249
  // Predicated region
  $region34: #{cdeepfm_forward.1} parent=0 // pred_check
    _
  $region35: #{cdeepfm_forward.1} parent=0 // pred_check_branch
    %1254 = sbr.rel (0) target = $region37
  $region36: #{cdeepfm_forward.1} parent=0 // pred_region
    _
  $region37: #{cdeepfm_forward.1} parent=0 // pred_fallthru
    _
  // Predicated region
  $region38: #{cdeepfm_forward.1} parent=0 // pred_check
    _
  $region39: #{cdeepfm_forward.1} parent=0 // pred_check_branch
    %1256 = sbr.rel (0) target = $region41
  $region40: #{cdeepfm_forward.1} parent=0 // pred_region
    _
  $region41: #{cdeepfm_forward.1} parent=0 // pred_fallthru
    _

</llo_original>
